<compile_context>
chip_gen: v5e
topology: v5e:2x2
jax: 0.10.0
libtpu: 0.0.40
codegen_flags: <defaults>
</compile_context>

<pallas_src>
import functools

import jax
import jax.numpy as jnp
from jax import lax
from jax.experimental import pallas as pl
from jax.experimental.pallas import tpu as pltpu


def _attention_kernel(x_ref, wqkv_ref, gamma_ref, beta_ref, wout_ref, bout_ref,
                      o_ref, *, heads, dim_head, eps, approx_recip):
    bt, n, d = x_ref.shape                       # (Bt, N, D) tile
    inner = heads * dim_head
    rows = bt * n
    mxu_dtype = wqkv_ref.dtype                   # weights pre-cast in the wrapper

    # ---- LayerNorm over the feature dim (f32 VPU math), all Bt*N rows at once.
    x = x_ref[...].astype(jnp.float32).reshape(rows, d)
    mean = jnp.mean(x, axis=-1, keepdims=True)
    var = jnp.mean((x - mean) ** 2, axis=-1, keepdims=True)
    xn = (x - mean) * lax.rsqrt(var + eps)
    xn = xn * gamma_ref[...] + beta_ref[...]     # broadcast (1, D)

    # ---- QKV projection: one wide MXU matmul, f32 accumulation.
    #      (softmax scale is already folded into the q columns of wqkv.)
    qkv = jnp.dot(xn.astype(mxu_dtype), wqkv_ref[...],
                  preferred_element_type=jnp.float32)          # (rows, 3*inner)

    # ---- '(b n) (h e) -> (h b) n e' once per q/k/v (no per-head lane slices).
    def split_heads(t):                                         # (rows, inner)
        t = t.reshape(rows, heads, dim_head).transpose(1, 0, 2)  # (h, rows, e)
        return t.reshape(heads * bt, n, dim_head)                # (h*bt, n, e)

    q = split_heads(qkv[:, 0 * inner:1 * inner])
    k = split_heads(qkv[:, 1 * inner:2 * inner])
    v = split_heads(qkv[:, 2 * inner:3 * inner])

    # ---- Scores: one batched contraction (batch dim = heads*Bt), contracting the
    #      last dims directly (no explicit k transpose).
    s = jnp.einsum('xnd,xmd->xnm', q.astype(mxu_dtype), k.astype(mxu_dtype),
                   preferred_element_type=jnp.float32)          # (h*bt, n, n)

    # ---- Softmax (f32, max-subtracted). Normalization is deferred until after
    #      the PV matmul so the VPU scales (h*bt, n, e) instead of (h*bt, n, n).
    s = s - jnp.max(s, axis=-1, keepdims=True)
    p = jnp.exp(s)
    denom = jnp.sum(p, axis=-1, keepdims=True)                  # (h*bt, n, 1)

    ctx = jnp.einsum('xnm,xmd->xnd', p.astype(mxu_dtype), v.astype(mxu_dtype),
                     preferred_element_type=jnp.float32)        # (h*bt, n, e)
    ctx = ctx * pl.reciprocal(denom, approx=approx_recip)       # EUP reciprocal

    # ---- Output projection, head-major: out = sum_h ctx[h] @ w_out[h] + b.
    #      Avoids the 'h n e -> n (h e)' merge relayout entirely.
    ctx_h = ctx.reshape(heads, rows, dim_head)                  # leading-dim regroup
    out = jnp.dot(ctx_h[0].astype(mxu_dtype), wout_ref[0],
                  preferred_element_type=jnp.float32)           # (rows, Dp)
    for h in range(1, heads):
        out = out + jnp.dot(ctx_h[h].astype(mxu_dtype), wout_ref[h],
                            preferred_element_type=jnp.float32)
    out = out + bout_ref[...]                                   # f32 bias

    o_ref[...] = out.reshape(bt, n, -1).astype(o_ref.dtype)


def prepare_params(params, *, heads, dim_head, mxu_dtype=jnp.bfloat16):
    """One-time parameter prep (hoisted out of the forward hot path):
    fold the softmax scale into w_q, pad the output feature dim to a lane
    multiple, reshape w_out head-major, cast big weights to the MXU dtype."""
    w_qkv, gamma, beta, w_out, b_out = params
    D = w_qkv.shape[0]
    inner = heads * dim_head
    scale = float(dim_head) ** -0.5

    w_q = w_qkv[:, :inner] * scale                      # fold scale into q columns
    w_qkv_p = jnp.concatenate([w_q, w_qkv[:, inner:]], axis=1).astype(mxu_dtype)

    D_pad = ((D + 127) // 128) * 128                    # lane-dense output stores
    if D_pad != D:
        w_out = jnp.pad(w_out, ((0, 0), (0, D_pad - D)))
        b_out = jnp.pad(b_out, ((0, 0), (0, D_pad - D)))
    w_out_h = w_out.reshape(heads, dim_head, D_pad).astype(mxu_dtype)

    return (w_qkv_p,
            gamma.astype(jnp.float32),
            beta.astype(jnp.float32),
            w_out_h,
            b_out.astype(jnp.float32))


def attention_forward(x, prepared_params, *, heads, dim_head, block_b=8,
                      approx_recip=False, vmem_limit_bytes=48 * 1024 * 1024):
    w_qkv, gamma, beta, w_out_h, b_out = prepared_params
    B, N, D = x.shape
    inner = heads * dim_head
    D_pad = b_out.shape[-1]

    # Largest divisor of B not exceeding block_b: fills the MXU M-dim and
    # amortizes per-grid-step overhead. Keep modest on v7x (64 MiB VMEM); can be
    # raised on v5e/v6e together with vmem_limit_bytes.
    bt = 1
    for cand in range(min(block_b, B), 0, -1):
        if B % cand == 0:
            bt = cand
            break

    kernel = functools.partial(_attention_kernel, heads=heads,
                               dim_head=dim_head, eps=1e-5,
                               approx_recip=approx_recip)

    out = pl.pallas_call(
        kernel,
        out_shape=jax.ShapeDtypeStruct((B, N, D_pad), x.dtype),
        grid_spec=pltpu.PrefetchScalarGridSpec(
            num_scalar_prefetch=0,
            grid=(B // bt,),
            in_specs=[
                pl.BlockSpec((bt, N, D), lambda b: (b, 0, 0)),            # x
                pl.BlockSpec((D, 3 * inner), lambda b: (0, 0)),           # w_qkv
                pl.BlockSpec((1, D), lambda b: (0, 0)),                   # gamma
                pl.BlockSpec((1, D), lambda b: (0, 0)),                   # beta
                pl.BlockSpec((heads, dim_head, D_pad), lambda b: (0, 0, 0)),  # w_out
                pl.BlockSpec((1, D_pad), lambda b: (0, 0)),               # b_out
            ],
            out_specs=pl.BlockSpec((bt, N, D_pad), lambda b: (b, 0, 0)),
        ),
        compiler_params=pltpu.CompilerParams(
            dimension_semantics=("parallel",),
            vmem_limit_bytes=vmem_limit_bytes,
        ),
    )(x, w_qkv, gamma, beta, w_out_h, b_out)

    return out[..., :D] if D_pad != D else out


def attention_reference(x, params, *, heads, dim_head):
    """Pure-JAX reference mirroring the PyTorch module (dropout=0)."""
    w_qkv, gamma, beta, w_out, b_out = params
    scale = float(dim_head) ** -0.5
    mean = jnp.mean(x, axis=-1, keepdims=True)
    var = jnp.mean((x - mean) ** 2, axis=-1, keepdims=True)
    xn = (x - mean) / jnp.sqrt(var + 1e-5) * gamma[0] + beta[0]
    qkv = xn @ w_qkv
    inner = heads * dim_head
    q, k, v = qkv[..., :inner], qkv[..., inner:2 * inner], qkv[..., 2 * inner:]

    def split_heads(t):
        B, N, _ = t.shape
        return t.reshape(B, N, heads, dim_head).transpose(0, 2, 1, 3)

    q, k, v = map(split_heads, (q, k, v))
    dots = jnp.einsum('bhnd,bhmd->bhnm', q, k) * scale
    attn = jax.nn.softmax(dots, axis=-1)
    out = jnp.einsum('bhnm,bhmd->bhnd', attn, v)
    B, _, N, _ = out.shape
    out = out.transpose(0, 2, 1, 3).reshape(B, N, inner)
    return out @ w_out + b_out[0]


if __name__ == "__main__":
    # Small shapes: batch=2, seq=8, dim=32, heads=4, dim_head=16 -> inner_dim=64
    B, N, D = 2, 8, 32
    heads, dim_head = 4, 16
    inner = heads * dim_head

    key = jax.random.PRNGKey(0)
    kx, kqkv, kout, kbout = jax.random.split(key, 4)

    x = jax.random.normal(kx, (B, N, D), dtype=jnp.float32)
    w_qkv = jax.random.normal(kqkv, (D, 3 * inner), dtype=jnp.float32) * 0.05
    gamma = jnp.ones((1, D), dtype=jnp.float32)    # nn.LayerNorm default weight
    beta = jnp.zeros((1, D), dtype=jnp.float32)    # nn.LayerNorm default bias
    w_out = jax.random.normal(kout, (inner, D), dtype=jnp.float32) * 0.05
    b_out = jax.random.normal(kbout, (1, D), dtype=jnp.float32) * 0.05

    params = (w_qkv, gamma, beta, w_out, b_out)
    ref = attention_reference(x, params, heads=heads, dim_head=dim_head)

    # f32-into-MXU path with exact reciprocal: tight check vs the reference.
    prep_f32 = prepare_params(params, heads=heads, dim_head=dim_head,
                              mxu_dtype=jnp.float32)
    out = attention_forward(x, prep_f32, heads=heads, dim_head=dim_head,
                            approx_recip=False)
    out = jax.block_until_ready(out)
    assert out.shape == (B, N, D)
    assert jnp.allclose(out, ref, atol=1e-4, rtol=1e-4), "mismatch vs reference (f32)"

    # bf16-into-MXU path (f32 accumulation, approx softmax reciprocal): looser.
    prep_bf16 = prepare_params(params, heads=heads, dim_head=dim_head,
                               mxu_dtype=jnp.bfloat16)
    out_bf = attention_forward(x, prep_bf16, heads=heads, dim_head=dim_head,
                               approx_recip=True)
    out_bf = jax.block_until_ready(out_bf)
    assert out_bf.shape == (B, N, D)
    assert jnp.allclose(out_bf, ref, atol=5e-2, rtol=5e-2), "mismatch vs reference (bf16 MXU)"

    print("KERNEL_OK")
</pallas_src>

<mosaic_0001>
module attributes {stable_mosaic.version = 11 : i64} {
  func.func @_attention_kernel(%arg0: i32, %arg1: memref<2x8x32xf32, #tpu.memory_space<vmem>>, %arg2: memref<32x192xf32, #tpu.memory_space<vmem>>, %arg3: memref<1x32xf32, #tpu.memory_space<vmem>>, %arg4: memref<1x32xf32, #tpu.memory_space<vmem>>, %arg5: memref<4x16x128xf32, #tpu.memory_space<vmem>>, %arg6: memref<1x128xf32, #tpu.memory_space<vmem>>, %arg7: memref<2x8x128xf32, #tpu.memory_space<vmem>>) attributes {dimension_semantics = [#tpu.dimension_semantics<parallel>], iteration_bounds = array<i64: 1>, scalar_prefetch = 0 : i64, scratch_operands = 0 : i64, tpu.core_type = #tpu.core_type<tc>, window_params = [{transform_indices = @transform_0, window_bounds = array<i64: 2, 8, 32>}, {pipeline_mode = #tpu.pipeline_mode<synchronous>, transform_indices = @transform_1, window_bounds = array<i64: 32, 192>}, {pipeline_mode = #tpu.pipeline_mode<synchronous>, transform_indices = @transform_2, window_bounds = array<i64: 1, 32>}, {pipeline_mode = #tpu.pipeline_mode<synchronous>, transform_indices = @transform_3, window_bounds = array<i64: 1, 32>}, {pipeline_mode = #tpu.pipeline_mode<synchronous>, transform_indices = @transform_4, window_bounds = array<i64: 4, 16, 128>}, {pipeline_mode = #tpu.pipeline_mode<synchronous>, transform_indices = @transform_5, window_bounds = array<i64: 1, 128>}, {transform_indices = @transform_6, window_bounds = array<i64: 2, 8, 128>}]} {
    %c0 = arith.constant 0 : index
    %c0_0 = arith.constant 0 : index
    %c0_1 = arith.constant 0 : index
    %0 = vector.load %arg1[%c0, %c0_0, %c0_1] : memref<2x8x32xf32, #tpu.memory_space<vmem>>, vector<2x8x32xf32>
    %1 = vector.shape_cast %0 : vector<2x8x32xf32> to vector<16x32xf32>
    %cst = arith.constant dense<0.000000e+00> : vector<16xf32>
    %2 = vector.multi_reduction <add>, %1, %cst [1] : vector<16x32xf32> to vector<16xf32>
    %3 = vector.shape_cast %2 : vector<16xf32> to vector<16x1xf32>
    %cst_2 = arith.constant 3.200000e+01 : f32
    %4 = vector.broadcast %cst_2 : f32 to vector<16x1xf32>
    %5 = arith.divf %3, %4 : vector<16x1xf32>
    %6 = vector.broadcast %5 : vector<16x1xf32> to vector<16x32xf32>
    %7 = arith.subf %1, %6 : vector<16x32xf32>
    %8 = arith.mulf %7, %7 : vector<16x32xf32>
    %cst_3 = arith.constant dense<0.000000e+00> : vector<16xf32>
    %9 = vector.multi_reduction <add>, %8, %cst_3 [1] : vector<16x32xf32> to vector<16xf32>
    %10 = vector.shape_cast %9 : vector<16xf32> to vector<16x1xf32>
    %cst_4 = arith.constant 3.200000e+01 : f32
    %11 = vector.broadcast %cst_4 : f32 to vector<16x1xf32>
    %12 = arith.divf %10, %11 : vector<16x1xf32>
    %13 = vector.broadcast %5 : vector<16x1xf32> to vector<16x32xf32>
    %14 = arith.subf %1, %13 : vector<16x32xf32>
    %cst_5 = arith.constant 9.99999974E-6 : f32
    %15 = vector.broadcast %cst_5 : f32 to vector<16x1xf32>
    %16 = arith.addf %12, %15 : vector<16x1xf32>
    %17 = math.rsqrt %16 : vector<16x1xf32>
    %18 = vector.broadcast %17 : vector<16x1xf32> to vector<16x32xf32>
    %19 = arith.mulf %14, %18 : vector<16x32xf32>
    %c0_6 = arith.constant 0 : index
    %c0_7 = arith.constant 0 : index
    %20 = vector.load %arg3[%c0_6, %c0_7] : memref<1x32xf32, #tpu.memory_space<vmem>>, vector<1x32xf32>
    %21 = vector.broadcast %20 : vector<1x32xf32> to vector<16x32xf32>
    %22 = arith.mulf %19, %21 : vector<16x32xf32>
    %c0_8 = arith.constant 0 : index
    %c0_9 = arith.constant 0 : index
    %23 = vector.load %arg4[%c0_8, %c0_9] : memref<1x32xf32, #tpu.memory_space<vmem>>, vector<1x32xf32>
    %24 = vector.broadcast %23 : vector<1x32xf32> to vector<16x32xf32>
    %25 = arith.addf %22, %24 : vector<16x32xf32>
    %c0_10 = arith.constant 0 : index
    %c0_11 = arith.constant 0 : index
    %26 = vector.load %arg2[%c0_10, %c0_11] : memref<32x192xf32, #tpu.memory_space<vmem>>, vector<32x192xf32>
    %cst_12 = arith.constant dense<0.000000e+00> : vector<16x192xf32>
    %27 = tpu.matmul %25, %26, %cst_12 {dimension_numbers = #tpu.dot_dimension_numbers<[1], [0], [0], [1], [0, 0, 1, 1], [], []>} : vector<16x32xf32>, vector<32x192xf32>, vector<16x192xf32> -> vector<16x192xf32>
    %28 = vector.extract_strided_slice %27 {offsets = [0, 0], sizes = [16, 64], strides = [1, 1]} : vector<16x192xf32> to vector<16x64xf32>
    %29 = vector.shape_cast %28 : vector<16x64xf32> to vector<16x4x16xf32>
    %30 = tpu.transpose %29, [1, 0, 2] : vector<16x4x16xf32> -> vector<4x16x16xf32>
    %31 = vector.shape_cast %30 : vector<4x16x16xf32> to vector<8x8x16xf32>
    %32 = vector.extract_strided_slice %27 {offsets = [0, 64], sizes = [16, 64], strides = [1, 1]} : vector<16x192xf32> to vector<16x64xf32>
    %33 = vector.shape_cast %32 : vector<16x64xf32> to vector<16x4x16xf32>
    %34 = tpu.transpose %33, [1, 0, 2] : vector<16x4x16xf32> -> vector<4x16x16xf32>
    %35 = vector.shape_cast %34 : vector<4x16x16xf32> to vector<8x8x16xf32>
    %36 = vector.extract_strided_slice %27 {offsets = [0, 128], sizes = [16, 64], strides = [1, 1]} : vector<16x192xf32> to vector<16x64xf32>
    %37 = vector.shape_cast %36 : vector<16x64xf32> to vector<16x4x16xf32>
    %38 = tpu.transpose %37, [1, 0, 2] : vector<16x4x16xf32> -> vector<4x16x16xf32>
    %39 = vector.shape_cast %38 : vector<4x16x16xf32> to vector<8x8x16xf32>
    "tpu.trace_start"() <{level = 10 : i32, message = "xnd,xmd->xnm"}> : () -> ()
    %cst_13 = arith.constant dense<0.000000e+00> : vector<8x8x8xf32>
    %40 = tpu.matmul %31, %35, %cst_13 {dimension_numbers = #tpu.dot_dimension_numbers<[2], [2], [1], [1], [0, 0, 0, 1, 1, 1], [0], [0]>} : vector<8x8x16xf32>, vector<8x8x16xf32>, vector<8x8x8xf32> -> vector<8x8x8xf32>
    "tpu.trace_stop"() : () -> ()
    %cst_14 = arith.constant dense<0xFF800000> : vector<8x8xf32>
    %41 = vector.multi_reduction <maximumf>, %40, %cst_14 [2] : vector<8x8x8xf32> to vector<8x8xf32>
    %42 = vector.shape_cast %41 : vector<8x8xf32> to vector<8x8x1xf32>
    %43 = vector.broadcast %42 : vector<8x8x1xf32> to vector<8x8x8xf32>
    %44 = arith.subf %40, %43 : vector<8x8x8xf32>
    %45 = math.exp %44 : vector<8x8x8xf32>
    %cst_15 = arith.constant dense<0.000000e+00> : vector<8x8xf32>
    %46 = vector.multi_reduction <add>, %45, %cst_15 [2] : vector<8x8x8xf32> to vector<8x8xf32>
    %47 = vector.shape_cast %46 : vector<8x8xf32> to vector<8x8x1xf32>
    "tpu.trace_start"() <{level = 10 : i32, message = "xnm,xmd->xnd"}> : () -> ()
    %cst_16 = arith.constant dense<0.000000e+00> : vector<8x8x16xf32>
    %48 = tpu.matmul %45, %39, %cst_16 {dimension_numbers = #tpu.dot_dimension_numbers<[2], [1], [1], [2], [0, 0, 0, 1, 1, 2], [0], [0]>} : vector<8x8x8xf32>, vector<8x8x16xf32>, vector<8x8x16xf32> -> vector<8x8x16xf32>
    "tpu.trace_stop"() : () -> ()
    %49 = tpu.reciprocal %47 : vector<8x8x1xf32> -> vector<8x8x1xf32>
    %50 = vector.broadcast %49 : vector<8x8x1xf32> to vector<8x8x16xf32>
    %51 = arith.mulf %48, %50 : vector<8x8x16xf32>
    %52 = vector.shape_cast %51 : vector<8x8x16xf32> to vector<4x16x16xf32>
    %53 = vector.extract_strided_slice %52 {offsets = [0, 0, 0], sizes = [1, 16, 16], strides = [1, 1, 1]} : vector<4x16x16xf32> to vector<1x16x16xf32>
    %54 = vector.shape_cast %53 : vector<1x16x16xf32> to vector<16x16xf32>
    %c0_17 = arith.constant 0 : index
    %c0_18 = arith.constant 0 : index
    %c0_19 = arith.constant 0 : index
    %55 = vector.load %arg5[%c0_17, %c0_18, %c0_19] : memref<4x16x128xf32, #tpu.memory_space<vmem>>, vector<1x16x128xf32>
    %56 = vector.shape_cast %55 : vector<1x16x128xf32> to vector<16x128xf32>
    %cst_20 = arith.constant dense<0.000000e+00> : vector<16x128xf32>
    %57 = tpu.matmul %54, %56, %cst_20 {dimension_numbers = #tpu.dot_dimension_numbers<[1], [0], [0], [1], [0, 0, 1, 1], [], []>} : vector<16x16xf32>, vector<16x128xf32>, vector<16x128xf32> -> vector<16x128xf32>
    %58 = vector.extract_strided_slice %52 {offsets = [1, 0, 0], sizes = [1, 16, 16], strides = [1, 1, 1]} : vector<4x16x16xf32> to vector<1x16x16xf32>
    %59 = vector.shape_cast %58 : vector<1x16x16xf32> to vector<16x16xf32>
    %c1 = arith.constant 1 : index
    %c0_21 = arith.constant 0 : index
    %c0_22 = arith.constant 0 : index
    %60 = vector.load %arg5[%c1, %c0_21, %c0_22] : memref<4x16x128xf32, #tpu.memory_space<vmem>>, vector<1x16x128xf32>
    %61 = vector.shape_cast %60 : vector<1x16x128xf32> to vector<16x128xf32>
    %cst_23 = arith.constant dense<0.000000e+00> : vector<16x128xf32>
    %62 = tpu.matmul %59, %61, %cst_23 {dimension_numbers = #tpu.dot_dimension_numbers<[1], [0], [0], [1], [0, 0, 1, 1], [], []>} : vector<16x16xf32>, vector<16x128xf32>, vector<16x128xf32> -> vector<16x128xf32>
    %63 = arith.addf %57, %62 : vector<16x128xf32>
    %64 = vector.extract_strided_slice %52 {offsets = [2, 0, 0], sizes = [1, 16, 16], strides = [1, 1, 1]} : vector<4x16x16xf32> to vector<1x16x16xf32>
    %65 = vector.shape_cast %64 : vector<1x16x16xf32> to vector<16x16xf32>
    %c2 = arith.constant 2 : index
    %c0_24 = arith.constant 0 : index
    %c0_25 = arith.constant 0 : index
    %66 = vector.load %arg5[%c2, %c0_24, %c0_25] : memref<4x16x128xf32, #tpu.memory_space<vmem>>, vector<1x16x128xf32>
    %67 = vector.shape_cast %66 : vector<1x16x128xf32> to vector<16x128xf32>
    %cst_26 = arith.constant dense<0.000000e+00> : vector<16x128xf32>
    %68 = tpu.matmul %65, %67, %cst_26 {dimension_numbers = #tpu.dot_dimension_numbers<[1], [0], [0], [1], [0, 0, 1, 1], [], []>} : vector<16x16xf32>, vector<16x128xf32>, vector<16x128xf32> -> vector<16x128xf32>
    %69 = arith.addf %63, %68 : vector<16x128xf32>
    %70 = vector.extract_strided_slice %52 {offsets = [3, 0, 0], sizes = [1, 16, 16], strides = [1, 1, 1]} : vector<4x16x16xf32> to vector<1x16x16xf32>
    %71 = vector.shape_cast %70 : vector<1x16x16xf32> to vector<16x16xf32>
    %c3 = arith.constant 3 : index
    %c0_27 = arith.constant 0 : index
    %c0_28 = arith.constant 0 : index
    %72 = vector.load %arg5[%c3, %c0_27, %c0_28] : memref<4x16x128xf32, #tpu.memory_space<vmem>>, vector<1x16x128xf32>
    %73 = vector.shape_cast %72 : vector<1x16x128xf32> to vector<16x128xf32>
    %cst_29 = arith.constant dense<0.000000e+00> : vector<16x128xf32>
    %74 = tpu.matmul %71, %73, %cst_29 {dimension_numbers = #tpu.dot_dimension_numbers<[1], [0], [0], [1], [0, 0, 1, 1], [], []>} : vector<16x16xf32>, vector<16x128xf32>, vector<16x128xf32> -> vector<16x128xf32>
    %75 = arith.addf %69, %74 : vector<16x128xf32>
    %c0_30 = arith.constant 0 : index
    %c0_31 = arith.constant 0 : index
    %76 = vector.load %arg6[%c0_30, %c0_31] : memref<1x128xf32, #tpu.memory_space<vmem>>, vector<1x128xf32>
    %77 = vector.broadcast %76 : vector<1x128xf32> to vector<16x128xf32>
    %78 = arith.addf %75, %77 : vector<16x128xf32>
    %79 = vector.shape_cast %78 : vector<16x128xf32> to vector<2x8x128xf32>
    %c0_32 = arith.constant 0 : index
    %c0_33 = arith.constant 0 : index
    %c0_34 = arith.constant 0 : index
    %80 = vector.load %arg7[%c0_32, %c0_33, %c0_34] : memref<2x8x128xf32, #tpu.memory_space<vmem>>, vector<2x8x128xf32>
    tpu.vector_store %arg7[%c0_32, %c0_33, %c0_34], %79 {strides = array<i32>} : memref<2x8x128xf32, #tpu.memory_space<vmem>>, vector<2x8x128xf32>,
    return
  }
  func.func @transform_0(%arg0: i32) -> (i32, i32, i32) {
    %c0_i32 = arith.constant 0 : i32
    %c0_i32_0 = arith.constant 0 : i32
    %c0_i32_1 = arith.constant 0 : i32
    return %arg0, %c0_i32, %c0_i32_0 : i32, i32, i32
  }
  func.func @transform_1(%arg0: i32) -> (i32, i32) {
    %c0_i32 = arith.constant 0 : i32
    %c0_i32_0 = arith.constant 0 : i32
    %c0_i32_1 = arith.constant 0 : i32
    return %c0_i32, %c0_i32_0 : i32, i32
  }
  func.func @transform_2(%arg0: i32) -> (i32, i32) {
    %c0_i32 = arith.constant 0 : i32
    %c0_i32_0 = arith.constant 0 : i32
    %c0_i32_1 = arith.constant 0 : i32
    return %c0_i32, %c0_i32_0 : i32, i32
  }
  func.func @transform_3(%arg0: i32) -> (i32, i32) {
    %c0_i32 = arith.constant 0 : i32
    %c0_i32_0 = arith.constant 0 : i32
    %c0_i32_1 = arith.constant 0 : i32
    return %c0_i32, %c0_i32_0 : i32, i32
  }
  func.func @transform_4(%arg0: i32) -> (i32, i32, i32) {
    %c0_i32 = arith.constant 0 : i32
    %c0_i32_0 = arith.constant 0 : i32
    %c0_i32_1 = arith.constant 0 : i32
    %c0_i32_2 = arith.constant 0 : i32
    return %c0_i32, %c0_i32_0, %c0_i32_1 : i32, i32, i32
  }
  func.func @transform_5(%arg0: i32) -> (i32, i32) {
    %c0_i32 = arith.constant 0 : i32
    %c0_i32_0 = arith.constant 0 : i32
    %c0_i32_1 = arith.constant 0 : i32
    return %c0_i32, %c0_i32_0 : i32, i32
  }
  func.func @transform_6(%arg0: i32) -> (i32, i32, i32) {
    %c0_i32 = arith.constant 0 : i32
    %c0_i32_0 = arith.constant 0 : i32
    %c0_i32_1 = arith.constant 0 : i32
    return %arg0, %c0_i32, %c0_i32_0 : i32, i32, i32
  }
}

</mosaic_0001>

<llo_original>
// kernel: tpu_custom_call.1
$region0: #{tpu_custom_call.1}
  #allocation0 [shape = 'u32[]', space=smem, size = 0x4, offset = 0x4, fixed_abs, tag = 'smem constant byte address 0x4 - core index']
  #allocation1 [shape = 'u32[72,128]{1,0:T(1,128)}', space=vmem, size = 0x9000, scoped, tag = 'internal scratch']
  %s0 = inlined_call_operand.hbm [shape: f32[2,8,32], index: 0, kind: input, shape index: {}]
  %s1 = inlined_call_operand.hbm [shape: f32[32,192], index: 1, kind: input, shape index: {}]
  %s2 = inlined_call_operand.vmem [shape: f32[1,32], index: 2, kind: input, shape index: {}]
  %s3 = inlined_call_operand.vmem [shape: f32[1,32], index: 3, kind: input, shape index: {}]
  %s4 = inlined_call_operand.hbm [shape: f32[4,16,128], index: 4, kind: input, shape index: {}]
  %s5 = inlined_call_operand.vmem [shape: f32[1,128], index: 5, kind: input, shape index: {}]
  %s6 = inlined_call_operand.hbm [shape: f32[2,8,128], index: 6, kind: output, shape index: {}]
  %s7 = sld [smem:[#allocation0]]
  $region46: #{tpu_custom_call.1} parent=0
    _
  %s9 = ssub.s32 1, %s7
  %s10 = scalar_select 0, %s9, %s7
  $region1: #{tpu_custom_call.1} parent=0
    #allocation2 [shape = 'u8[8192]{0}', space=vmem, size = 0x2000, scoped, tag = 'input window, operand 0, single buffered']
    #allocation3 [shape = 's32[1]{0}', space=sflag, size = 0x4, scoped, tag = 'scoped memory for tpu_custom_call.1']
    #allocation4 [shape = 's32[1]{0}', space=sflag, size = 0x4, scoped, tag = 'scoped memory for tpu_custom_call.1']
    #allocation5 [shape = 'u8[32768]{0}', space=vmem, size = 0x8000, scoped, tag = 'input window, operand 1, single buffered']
    #allocation6 [shape = 's32[1]{0}', space=sflag, size = 0x4, scoped, tag = 'scoped memory for tpu_custom_call.1']
    #allocation7 [shape = 'u8[32768]{0}', space=vmem, size = 0x8000, scoped, tag = 'input window, operand 4, single buffered']
    #allocation8 [shape = 'u8[8192]{0}', space=vmem, size = 0x2000, scoped, tag = 'output window, operand 0, single buffered']
    %11 = vsyncpa [#allocation3], 0
    %12 = vsyncpa [#allocation6], 0
    %13 = vsyncpa [#allocation4], 0
    // Predicated region
    $region2: #{tpu_custom_call.1} parent=1 // pred_check
      _
    $region3: #{tpu_custom_call.1} parent=1 // pred_check_branch
      %15 = sbr.rel (0) target = $region5
    $region4: #{tpu_custom_call.1} parent=1 // pred_region
      %17 = vsyncadd [#allocation3], 0
      %s18 = sshll.u32 %s0, 4
      %s19 = int_to_ptr.hbm [resolvable:$true] %s18
      %s20 = sshll.u32 [#allocation2], 4
      %s21 = int_to_ptr.vmem [resolvable:$true] %s20
      %26 = dma.hbm_to_vmem [thread:$0]  %s19, 256, %s21, [#allocation3], 128, 128, 8
    $region5: #{tpu_custom_call.1} parent=1 // pred_fallthru
      _
    // Predicated region
    $region6: #{tpu_custom_call.1} parent=1 // pred_check
      _
    $region7: #{tpu_custom_call.1} parent=1 // pred_check_branch
      %28 = sbr.rel (0) target = $region9
    $region8: #{tpu_custom_call.1} parent=1 // pred_region
      %30 = vsyncadd [#allocation6], 0
      %s31 = sshll.u32 %s1, 4
      %s32 = int_to_ptr.hbm [resolvable:$true] %s31
      %s33 = sshll.u32 [#allocation5], 4
      %s34 = int_to_ptr.vmem [resolvable:$true] %s33
      %39 = dma.hbm_to_vmem [thread:$0]  %s32, 1024, %s34, [#allocation6], 256, 256, 16
    $region9: #{tpu_custom_call.1} parent=1 // pred_fallthru
      _
    // Predicated region
    $region10: #{tpu_custom_call.1} parent=1 // pred_check
      _
    $region11: #{tpu_custom_call.1} parent=1 // pred_check_branch
      %41 = sbr.rel (0) target = $region13
    $region12: #{tpu_custom_call.1} parent=1 // pred_region
      _
    $region13: #{tpu_custom_call.1} parent=1 // pred_fallthru
      _
    // Predicated region
    $region14: #{tpu_custom_call.1} parent=1 // pred_check
      _
    $region15: #{tpu_custom_call.1} parent=1 // pred_check_branch
      %43 = sbr.rel (0) target = $region17
    $region16: #{tpu_custom_call.1} parent=1 // pred_region
      _
    $region17: #{tpu_custom_call.1} parent=1 // pred_fallthru
      _
    // Predicated region
    $region18: #{tpu_custom_call.1} parent=1 // pred_check
      _
    $region19: #{tpu_custom_call.1} parent=1 // pred_check_branch
      %45 = sbr.rel (0) target = $region21
    $region20: #{tpu_custom_call.1} parent=1 // pred_region
      %47 = vsyncadd [#allocation6], 0
      %s48 = sshll.u32 %s4, 4
      %s49 = int_to_ptr.hbm [resolvable:$true] %s48
      %s50 = sshll.u32 [#allocation7], 4
      %s51 = int_to_ptr.vmem [resolvable:$true] %s50
      %56 = dma.hbm_to_vmem [thread:$0]  %s49, 1024, %s51, [#allocation6], 128, 128, 8
    $region21: #{tpu_custom_call.1} parent=1 // pred_fallthru
      _
    // Predicated region
    $region22: #{tpu_custom_call.1} parent=1 // pred_check
      _
    $region23: #{tpu_custom_call.1} parent=1 // pred_check_branch
      %58 = sbr.rel (0) target = $region25
    $region24: #{tpu_custom_call.1} parent=1 // pred_region
      _
    $region25: #{tpu_custom_call.1} parent=1 // pred_fallthru
      _
    // Predicated region
    $region26: #{tpu_custom_call.1} parent=1 // pred_check
      _
    $region27: #{tpu_custom_call.1} parent=1 // pred_check_branch
      %60 = sbr.rel (0) target = $region29
    $region28: #{tpu_custom_call.1} parent=1 // pred_region
      %62 = dma.done [#allocation3], 256
    $region29: #{tpu_custom_call.1} parent=1 // pred_fallthru
      _
    // Predicated region
    $region30: #{tpu_custom_call.1} parent=1 // pred_check
      _
    $region31: #{tpu_custom_call.1} parent=1 // pred_check_branch
      %64 = sbr.rel (0) target = $region33
    $region32: #{tpu_custom_call.1} parent=1 // pred_region
      %66 = dma.done [#allocation6], 1024
    $region33: #{tpu_custom_call.1} parent=1 // pred_fallthru
      _
    // Predicated region
    $region34: #{tpu_custom_call.1} parent=1 // pred_check
      _
    $region35: #{tpu_custom_call.1} parent=1 // pred_check_branch
      %68 = sbr.rel (0) target = $region37
    $region36: #{tpu_custom_call.1} parent=1 // pred_region
      %70 = dma.done [#allocation6], 1024
    $region37: #{tpu_custom_call.1} parent=1 // pred_fallthru
      _
    %v71 = vld [vmem:[#allocation2] sm:$0xff]
    %v72 = vld [vmem:[#allocation2 + $0x8] sm:$0xff]
    %vm73 = vcmask 261120
    %v74 = vsel %vm73, %v71, 0.0
    %75 = vadd.xlane.f32.xlu0 %v74
    %v76 = vpop.xlane.xlu0 %75
    %v77 = vsel %vm73, %v72, 0.0
    %78 = vadd.xlane.f32.xlu0 %v77
    %v79 = vpop.xlane.xlu0 %78
    %v80 = vrcp.pop 32.0
    %v81 = vmul.f32 32.0, %v80
    %v82 = vsub.f32 1.0, %v81
    %v83 = vmul.f32 %v80, %v82
    %v84 = vadd.f32 %v80, %v83
    %vm85 = vweird.f32 %v80
    %v86 = vsel %vm85, %v80, %v84
    %v87 = vmul.f32 %v76, %v86
    %v88 = vmul.f32 %v79, %v86
    %v89 = vsub.f32 %v71, %v87
    %v90 = vsub.f32 %v72, %v88
    %v91 = vmul.f32 %v89, %v89
    %v92 = vmul.f32 %v90, %v90
    %v93 = vsel %vm73, %v91, 0.0
    %94 = vadd.xlane.f32.xlu0 %v93
    %v95 = vpop.xlane.xlu0 %94
    %v96 = vsel %vm73, %v92, 0.0
    %97 = vadd.xlane.f32.xlu0 %v96
    %v98 = vpop.xlane.xlu0 %97
    %v99 = vmul.f32 %v95, %v86
    %v100 = vmul.f32 %v98, %v86
    %v101 = vadd.f32 %v99, 1e-05
    %v102 = vadd.f32 %v100, 1e-05
    %v103 = vrsqrt.pop %v101
    %v104 = vmul.f32 %v103, %v101
    %v105 = vmul.f32 %v104, %v103
    %v106 = vmul.f32 0.5, %v105
    %v107 = vsub.f32 1.5, %v106
    %v108 = vmul.f32 %v103, %v107
    %vm109 = vweird.f32 %v101
    %vm110 = vweird.f32 %v103
    %vm111 = vmor %vm109, %vm110
    %v112 = vsel %vm111, %v103, %v108
    %v113 = vrsqrt.pop %v102
    %v114 = vmul.f32 %v113, %v102
    %v115 = vmul.f32 %v114, %v113
    %v116 = vmul.f32 0.5, %v115
    %v117 = vsub.f32 1.5, %v116
    %v118 = vmul.f32 %v113, %v117
    %vm119 = vweird.f32 %v102
    %vm120 = vweird.f32 %v113
    %vm121 = vmor %vm119, %vm120
    %v122 = vsel %vm121, %v113, %v118
    %v123 = vmul.f32 %v89, %v112
    %v124 = vmul.f32 %v90, %v122
    %v125 = vld [vmem:[%s2] sm:$0x1]
    %v127 = vperm.slane %v125, 0
    %v129 = vmul.f32 %v123, %v127
    %v130 = vmul.f32 %v124, %v127
    %v131 = vld [vmem:[%s3] sm:$0x1]
    %v133 = vperm.slane %v131, 0
    %v135 = vadd.f32 %v129, %v133
    %v136 = vadd.f32 %v130, %v133
    %v137 = vld [vmem:[#allocation5] sm:$0xff]
    %v138 = vld [vmem:[#allocation5 + $0x8] sm:$0xff]
    %v139 = vld [vmem:[#allocation5 + $0x10] sm:$0xff]
    %v140 = vld [vmem:[#allocation5 + $0x18] sm:$0xff]
    %v141 = vld [vmem:[#allocation5 + $0x20] sm:$0xff]
    %v142 = vld [vmem:[#allocation5 + $0x28] sm:$0xff]
    %v143 = vld [vmem:[#allocation5 + $0x30] sm:$0xff]
    %v144 = vld [vmem:[#allocation5 + $0x38] sm:$0xff]
    %v146 = vsel %vm73, %v135, 0
    %v149 = vsel %vm73, %v136, 0
    %151 = vmatpush.msra.mxu0 0.0
    %152 = vmatpush.msra.mxu0 0.0
    %153 = vmatpush.msra.mxu0 0.0
    %154 = vmatpush.msra.mxu0 0.0
    %155 = vmatpush.msra.mxu0 0.0
    %156 = vmatpush.msra.mxu0 0.0
    %157 = vmatpush.msra.mxu0 0.0
    %158 = vmatpush.msra.mxu0 0.0
    %159 = vmatpush.msra.mxu0 0.0
    %160 = vmatpush.msra.mxu0 0.0
    %161 = vmatpush.msra.mxu0 0.0
    %162 = vmatpush.msra.mxu0 0.0
    %163 = vmatpush.msra.mxu0 %v143
    %164 = vmatpush.msra.mxu0 %v141
    %165 = vmatpush.msra.mxu0 %v139
    %166 = vmatpush.msra.mxu0 %v137
    %167 = vmatmul.f32.gmra.mxu0 %v146
    %v168 = vpop.f32.mrf.mxu0
    %v169 = vadd.f32 0.0, %v168
    %170 = vmatmul.f32.gmra.mxu0 %v149
    %v171 = vpop.f32.mrf.mxu0
    %v172 = vadd.f32 0.0, %v171
    %173 = vdwg.mxu0
    %174 = vmatpush.msra.mxu0 0.0
    %175 = vmatpush.msra.mxu0 0.0
    %176 = vmatpush.msra.mxu0 0.0
    %177 = vmatpush.msra.mxu0 0.0
    %178 = vmatpush.msra.mxu0 0.0
    %179 = vmatpush.msra.mxu0 0.0
    %180 = vmatpush.msra.mxu0 0.0
    %181 = vmatpush.msra.mxu0 0.0
    %182 = vmatpush.msra.mxu0 0.0
    %183 = vmatpush.msra.mxu0 0.0
    %184 = vmatpush.msra.mxu0 0.0
    %185 = vmatpush.msra.mxu0 0.0
    %186 = vmatpush.msra.mxu0 %v144
    %187 = vmatpush.msra.mxu0 %v142
    %188 = vmatpush.msra.mxu0 %v140
    %189 = vmatpush.msra.mxu0 %v138
    %190 = vmatmul.f32.gmra.mxu0 %v146
    %v191 = vpop.f32.mrf.mxu0
    %v192 = vadd.f32 0.0, %v191
    %193 = vmatmul.f32.gmra.mxu0 %v149
    %v194 = vpop.f32.mrf.mxu0
    %v195 = vadd.f32 0.0, %v194
    %196 = vdwg.mxu0
    %199 = vrot.lane.b32.xlu0 %v169, 112
    %v200 = vpop.permute.xlu0 %199
    %201 = vrot.lane.b32.xlu0 %v172, 112
    %v202 = vpop.permute.xlu0 %201
    %205 = vrot.lane.b32.xlu0 %v169, 96
    %v206 = vpop.permute.xlu0 %205
    %207 = vrot.lane.b32.xlu0 %v172, 96
    %v208 = vpop.permute.xlu0 %207
    %211 = vrot.lane.b32.xlu0 %v169, 80
    %v212 = vpop.permute.xlu0 %211
    %213 = vrot.lane.b32.xlu0 %v172, 80
    %v214 = vpop.permute.xlu0 %213
    %v217 = vrot.slane %v206, 4
    %vm218 = vcmask 1047556
    %v219 = vsel %vm218, %v217, %v169
    %v220 = vrot.slane %v169, 4
    %v221 = vsel %vm218, %v206, %v220
    %v223 = vunpack.c.l.s4 1983009808
    %v224 = vunpack.c.0.s8 %v223
    %v225 = vperm.slane %v219, %v224
    %v227 = vunpack.c.l.s4 1983009808
    %v228 = vunpack.c.0.s8 %v227
    %v229 = vperm.slane %v221, %v228
    %v230 = vrot.slane %v212, 4
    %v231 = vsel %vm218, %v230, %v200
    %v232 = vrot.slane %v200, 4
    %v233 = vsel %vm218, %v212, %v232
    %v235 = vunpack.c.l.s4 1983009808
    %v236 = vunpack.c.0.s8 %v235
    %v237 = vperm.slane %v231, %v236
    %v239 = vunpack.c.l.s4 1983009808
    %v240 = vunpack.c.0.s8 %v239
    %v241 = vperm.slane %v233, %v240
    %v242 = vrot.slane %v237, 4
    %v243 = vsel %vm218, %v242, %v225
    %v244 = vrot.slane %v225, 4
    %v245 = vsel %vm218, %v237, %v244
    %v247 = vunpack.c.l.s4 1934713408
    %v248 = vunpack.c.0.s8 %v247
    %v249 = vperm.slane %v243, %v248
    %v251 = vunpack.c.l.s4 1934713408
    %v252 = vunpack.c.0.s8 %v251
    %v253 = vperm.slane %v245, %v252
    %v254 = vrot.slane %v241, 4
    %v255 = vsel %vm218, %v254, %v229
    %v256 = vrot.slane %v229, 4
    %v257 = vsel %vm218, %v241, %v256
    %v259 = vunpack.c.l.s4 1934713408
    %v260 = vunpack.c.0.s8 %v259
    %v261 = vperm.slane %v255, %v260
    %v263 = vunpack.c.l.s4 1934713408
    %v264 = vunpack.c.0.s8 %v263
    %v265 = vperm.slane %v257, %v264
    %v266 = vrot.slane %v249, 4
    %v267 = vsel %vm218, 0.0, %v266
    %v268 = vrot.slane %v253, 4
    %v269 = vsel %vm218, 0.0, %v268
    %v270 = vrot.slane %v261, 4
    %v271 = vsel %vm218, 0.0, %v270
    %v272 = vrot.slane %v265, 4
    %v273 = vsel %vm218, 0.0, %v272
    %v274 = vrot.slane %v208, 4
    %v275 = vsel %vm218, %v274, %v172
    %v276 = vrot.slane %v172, 4
    %v277 = vsel %vm218, %v208, %v276
    %v279 = vunpack.c.l.s4 1983009808
    %v280 = vunpack.c.0.s8 %v279
    %v281 = vperm.slane %v275, %v280
    %v283 = vunpack.c.l.s4 1983009808
    %v284 = vunpack.c.0.s8 %v283
    %v285 = vperm.slane %v277, %v284
    %v286 = vrot.slane %v214, 4
    %v287 = vsel %vm218, %v286, %v202
    %v288 = vrot.slane %v202, 4
    %v289 = vsel %vm218, %v214, %v288
    %v291 = vunpack.c.l.s4 1983009808
    %v292 = vunpack.c.0.s8 %v291
    %v293 = vperm.slane %v287, %v292
    %v295 = vunpack.c.l.s4 1983009808
    %v296 = vunpack.c.0.s8 %v295
    %v297 = vperm.slane %v289, %v296
    %v298 = vrot.slane %v293, 4
    %v299 = vsel %vm218, %v298, %v281
    %v300 = vrot.slane %v281, 4
    %v301 = vsel %vm218, %v293, %v300
    %v303 = vunpack.c.l.s4 1934713408
    %v304 = vunpack.c.0.s8 %v303
    %v305 = vperm.slane %v299, %v304
    %v307 = vunpack.c.l.s4 1934713408
    %v308 = vunpack.c.0.s8 %v307
    %v309 = vperm.slane %v301, %v308
    %v310 = vrot.slane %v297, 4
    %v311 = vsel %vm218, %v310, %v285
    %v312 = vrot.slane %v285, 4
    %v313 = vsel %vm218, %v297, %v312
    %v315 = vunpack.c.l.s4 1934713408
    %v316 = vunpack.c.0.s8 %v315
    %v317 = vperm.slane %v311, %v316
    %v319 = vunpack.c.l.s4 1934713408
    %v320 = vunpack.c.0.s8 %v319
    %v321 = vperm.slane %v313, %v320
    %v322 = vrot.slane %v305, 4
    %v323 = vsel %vm218, 0.0, %v322
    %v324 = vrot.slane %v309, 4
    %v325 = vsel %vm218, 0.0, %v324
    %v326 = vrot.slane %v317, 4
    %v327 = vsel %vm218, 0.0, %v326
    %v328 = vrot.slane %v321, 4
    %v329 = vsel %vm218, 0.0, %v328
    %v330 = vsel %vm218, %v268, %v249
    %v332 = vunpack.c.l.s4 1983009808
    %v333 = vunpack.c.0.s8 %v332
    %v334 = vperm.slane %v330, %v333
    %v335 = vrot.slane %v269, 4
    %v336 = vsel %vm218, %v335, %v267
    %v338 = vunpack.c.l.s4 1983009808
    %v339 = vunpack.c.0.s8 %v338
    %v340 = vperm.slane %v336, %v339
    %v341 = vsel %vm218, %v272, %v261
    %v343 = vunpack.c.l.s4 1983009808
    %v344 = vunpack.c.0.s8 %v343
    %v345 = vperm.slane %v341, %v344
    %v346 = vrot.slane %v273, 4
    %v347 = vsel %vm218, %v346, %v271
    %v349 = vunpack.c.l.s4 1983009808
    %v350 = vunpack.c.0.s8 %v349
    %v351 = vperm.slane %v347, %v350
    %v352 = vrot.slane %v340, 4
    %v353 = vsel %vm218, %v352, %v334
    %v354 = vrot.slane %v334, 4
    %v355 = vsel %vm218, %v340, %v354
    %v357 = vunpack.c.l.s4 1934713408
    %v358 = vunpack.c.0.s8 %v357
    %v359 = vperm.slane %v353, %v358
    %v361 = vunpack.c.l.s4 1934713408
    %v362 = vunpack.c.0.s8 %v361
    %v363 = vperm.slane %v355, %v362
    %v364 = vrot.slane %v351, 4
    %v365 = vsel %vm218, %v364, %v345
    %v366 = vrot.slane %v345, 4
    %v367 = vsel %vm218, %v351, %v366
    %v369 = vunpack.c.l.s4 1934713408
    %v370 = vunpack.c.0.s8 %v369
    %v371 = vperm.slane %v365, %v370
    %v373 = vunpack.c.l.s4 1934713408
    %v374 = vunpack.c.0.s8 %v373
    %v375 = vperm.slane %v367, %v374
    %v376 = vrot.slane %v371, 4
    %v377 = vsel %vm218, %v376, %v359
    %v378 = vrot.slane %v359, 4
    %v379 = vsel %vm218, %v371, %v378
    %v380 = vrot.slane %v375, 4
    %v381 = vsel %vm218, %v380, %v363
    %v382 = vrot.slane %v363, 4
    %v383 = vsel %vm218, %v375, %v382
    %v384 = vsel %vm218, %v324, %v305
    %v386 = vunpack.c.l.s4 1983009808
    %v387 = vunpack.c.0.s8 %v386
    %v388 = vperm.slane %v384, %v387
    %v389 = vrot.slane %v325, 4
    %v390 = vsel %vm218, %v389, %v323
    %v392 = vunpack.c.l.s4 1983009808
    %v393 = vunpack.c.0.s8 %v392
    %v394 = vperm.slane %v390, %v393
    %v395 = vsel %vm218, %v328, %v317
    %v397 = vunpack.c.l.s4 1983009808
    %v398 = vunpack.c.0.s8 %v397
    %v399 = vperm.slane %v395, %v398
    %v400 = vrot.slane %v329, 4
    %v401 = vsel %vm218, %v400, %v327
    %v403 = vunpack.c.l.s4 1983009808
    %v404 = vunpack.c.0.s8 %v403
    %v405 = vperm.slane %v401, %v404
    %v406 = vrot.slane %v394, 4
    %v407 = vsel %vm218, %v406, %v388
    %v408 = vrot.slane %v388, 4
    %v409 = vsel %vm218, %v394, %v408
    %v411 = vunpack.c.l.s4 1934713408
    %v412 = vunpack.c.0.s8 %v411
    %v413 = vperm.slane %v407, %v412
    %v415 = vunpack.c.l.s4 1934713408
    %v416 = vunpack.c.0.s8 %v415
    %v417 = vperm.slane %v409, %v416
    %v418 = vrot.slane %v405, 4
    %v419 = vsel %vm218, %v418, %v399
    %v420 = vrot.slane %v399, 4
    %v421 = vsel %vm218, %v405, %v420
    %v423 = vunpack.c.l.s4 1934713408
    %v424 = vunpack.c.0.s8 %v423
    %v425 = vperm.slane %v419, %v424
    %v427 = vunpack.c.l.s4 1934713408
    %v428 = vunpack.c.0.s8 %v427
    %v429 = vperm.slane %v421, %v428
    %v430 = vrot.slane %v425, 4
    %v431 = vsel %vm218, %v430, %v413
    %v432 = vrot.slane %v413, 4
    %v433 = vsel %vm218, %v425, %v432
    %v434 = vrot.slane %v429, 4
    %v435 = vsel %vm218, %v434, %v417
    %v436 = vrot.slane %v417, 4
    %v437 = vsel %vm218, %v429, %v436
    %438 = vrot.lane.b32.xlu0 %v169, 64
    %v439 = vpop.permute.xlu0 %438
    %440 = vrot.lane.b32.xlu0 %v172, 64
    %v441 = vpop.permute.xlu0 %440
    %442 = vrot.lane.b32.xlu0 %v200, 64
    %v443 = vpop.permute.xlu0 %442
    %444 = vrot.lane.b32.xlu0 %v202, 64
    %v445 = vpop.permute.xlu0 %444
    %446 = vrot.lane.b32.xlu0 %v206, 64
    %v447 = vpop.permute.xlu0 %446
    %448 = vrot.lane.b32.xlu0 %v208, 64
    %v449 = vpop.permute.xlu0 %448
    %450 = vrot.lane.b32.xlu0 %v212, 64
    %v451 = vpop.permute.xlu0 %450
    %452 = vrot.lane.b32.xlu0 %v214, 64
    %v453 = vpop.permute.xlu0 %452
    %v462 = vrot.slane %v447, 4
    %v463 = vsel %vm218, %v462, %v439
    %v464 = vrot.slane %v439, 4
    %v465 = vsel %vm218, %v447, %v464
    %v467 = vunpack.c.l.s4 1983009808
    %v468 = vunpack.c.0.s8 %v467
    %v469 = vperm.slane %v463, %v468
    %v471 = vunpack.c.l.s4 1983009808
    %v472 = vunpack.c.0.s8 %v471
    %v473 = vperm.slane %v465, %v472
    %v474 = vrot.slane %v451, 4
    %v475 = vsel %vm218, %v474, %v443
    %v476 = vrot.slane %v443, 4
    %v477 = vsel %vm218, %v451, %v476
    %v479 = vunpack.c.l.s4 1983009808
    %v480 = vunpack.c.0.s8 %v479
    %v481 = vperm.slane %v475, %v480
    %v483 = vunpack.c.l.s4 1983009808
    %v484 = vunpack.c.0.s8 %v483
    %v485 = vperm.slane %v477, %v484
    %v486 = vrot.slane %v481, 4
    %v487 = vsel %vm218, %v486, %v469
    %v488 = vrot.slane %v469, 4
    %v489 = vsel %vm218, %v481, %v488
    %v491 = vunpack.c.l.s4 1934713408
    %v492 = vunpack.c.0.s8 %v491
    %v493 = vperm.slane %v487, %v492
    %v495 = vunpack.c.l.s4 1934713408
    %v496 = vunpack.c.0.s8 %v495
    %v497 = vperm.slane %v489, %v496
    %v498 = vrot.slane %v485, 4
    %v499 = vsel %vm218, %v498, %v473
    %v500 = vrot.slane %v473, 4
    %v501 = vsel %vm218, %v485, %v500
    %v503 = vunpack.c.l.s4 1934713408
    %v504 = vunpack.c.0.s8 %v503
    %v505 = vperm.slane %v499, %v504
    %v507 = vunpack.c.l.s4 1934713408
    %v508 = vunpack.c.0.s8 %v507
    %v509 = vperm.slane %v501, %v508
    %v510 = vrot.slane %v493, 4
    %v511 = vsel %vm218, 0.0, %v510
    %v512 = vrot.slane %v497, 4
    %v513 = vsel %vm218, 0.0, %v512
    %v514 = vrot.slane %v505, 4
    %v515 = vsel %vm218, 0.0, %v514
    %v516 = vrot.slane %v509, 4
    %v517 = vsel %vm218, 0.0, %v516
    %v518 = vrot.slane %v449, 4
    %v519 = vsel %vm218, %v518, %v441
    %v520 = vrot.slane %v441, 4
    %v521 = vsel %vm218, %v449, %v520
    %v523 = vunpack.c.l.s4 1983009808
    %v524 = vunpack.c.0.s8 %v523
    %v525 = vperm.slane %v519, %v524
    %v527 = vunpack.c.l.s4 1983009808
    %v528 = vunpack.c.0.s8 %v527
    %v529 = vperm.slane %v521, %v528
    %v530 = vrot.slane %v453, 4
    %v531 = vsel %vm218, %v530, %v445
    %v532 = vrot.slane %v445, 4
    %v533 = vsel %vm218, %v453, %v532
    %v535 = vunpack.c.l.s4 1983009808
    %v536 = vunpack.c.0.s8 %v535
    %v537 = vperm.slane %v531, %v536
    %v539 = vunpack.c.l.s4 1983009808
    %v540 = vunpack.c.0.s8 %v539
    %v541 = vperm.slane %v533, %v540
    %v542 = vrot.slane %v537, 4
    %v543 = vsel %vm218, %v542, %v525
    %v544 = vrot.slane %v525, 4
    %v545 = vsel %vm218, %v537, %v544
    %v547 = vunpack.c.l.s4 1934713408
    %v548 = vunpack.c.0.s8 %v547
    %v549 = vperm.slane %v543, %v548
    %v551 = vunpack.c.l.s4 1934713408
    %v552 = vunpack.c.0.s8 %v551
    %v553 = vperm.slane %v545, %v552
    %v554 = vrot.slane %v541, 4
    %v555 = vsel %vm218, %v554, %v529
    %v556 = vrot.slane %v529, 4
    %v557 = vsel %vm218, %v541, %v556
    %v559 = vunpack.c.l.s4 1934713408
    %v560 = vunpack.c.0.s8 %v559
    %v561 = vperm.slane %v555, %v560
    %v563 = vunpack.c.l.s4 1934713408
    %v564 = vunpack.c.0.s8 %v563
    %v565 = vperm.slane %v557, %v564
    %v566 = vrot.slane %v549, 4
    %v567 = vsel %vm218, 0.0, %v566
    %v568 = vrot.slane %v553, 4
    %v569 = vsel %vm218, 0.0, %v568
    %v570 = vrot.slane %v561, 4
    %v571 = vsel %vm218, 0.0, %v570
    %v572 = vrot.slane %v565, 4
    %v573 = vsel %vm218, 0.0, %v572
    %v574 = vsel %vm218, %v512, %v493
    %v576 = vunpack.c.l.s4 1983009808
    %v577 = vunpack.c.0.s8 %v576
    %v578 = vperm.slane %v574, %v577
    %v579 = vrot.slane %v513, 4
    %v580 = vsel %vm218, %v579, %v511
    %v582 = vunpack.c.l.s4 1983009808
    %v583 = vunpack.c.0.s8 %v582
    %v584 = vperm.slane %v580, %v583
    %v585 = vsel %vm218, %v516, %v505
    %v587 = vunpack.c.l.s4 1983009808
    %v588 = vunpack.c.0.s8 %v587
    %v589 = vperm.slane %v585, %v588
    %v590 = vrot.slane %v517, 4
    %v591 = vsel %vm218, %v590, %v515
    %v593 = vunpack.c.l.s4 1983009808
    %v594 = vunpack.c.0.s8 %v593
    %v595 = vperm.slane %v591, %v594
    %v596 = vrot.slane %v584, 4
    %v597 = vsel %vm218, %v596, %v578
    %v598 = vrot.slane %v578, 4
    %v599 = vsel %vm218, %v584, %v598
    %v601 = vunpack.c.l.s4 1934713408
    %v602 = vunpack.c.0.s8 %v601
    %v603 = vperm.slane %v597, %v602
    %v605 = vunpack.c.l.s4 1934713408
    %v606 = vunpack.c.0.s8 %v605
    %v607 = vperm.slane %v599, %v606
    %v608 = vrot.slane %v595, 4
    %v609 = vsel %vm218, %v608, %v589
    %v610 = vrot.slane %v589, 4
    %v611 = vsel %vm218, %v595, %v610
    %v613 = vunpack.c.l.s4 1934713408
    %v614 = vunpack.c.0.s8 %v613
    %v615 = vperm.slane %v609, %v614
    %v617 = vunpack.c.l.s4 1934713408
    %v618 = vunpack.c.0.s8 %v617
    %v619 = vperm.slane %v611, %v618
    %v620 = vrot.slane %v615, 4
    %v621 = vsel %vm218, %v620, %v603
    %v622 = vrot.slane %v603, 4
    %v623 = vsel %vm218, %v615, %v622
    %v624 = vrot.slane %v619, 4
    %v625 = vsel %vm218, %v624, %v607
    %v626 = vrot.slane %v607, 4
    %v627 = vsel %vm218, %v619, %v626
    %v628 = vsel %vm218, %v568, %v549
    %v630 = vunpack.c.l.s4 1983009808
    %v631 = vunpack.c.0.s8 %v630
    %v632 = vperm.slane %v628, %v631
    %v633 = vrot.slane %v569, 4
    %v634 = vsel %vm218, %v633, %v567
    %v636 = vunpack.c.l.s4 1983009808
    %v637 = vunpack.c.0.s8 %v636
    %v638 = vperm.slane %v634, %v637
    %v639 = vsel %vm218, %v572, %v561
    %v641 = vunpack.c.l.s4 1983009808
    %v642 = vunpack.c.0.s8 %v641
    %v643 = vperm.slane %v639, %v642
    %v644 = vrot.slane %v573, 4
    %v645 = vsel %vm218, %v644, %v571
    %v647 = vunpack.c.l.s4 1983009808
    %v648 = vunpack.c.0.s8 %v647
    %v649 = vperm.slane %v645, %v648
    %v650 = vrot.slane %v638, 4
    %v651 = vsel %vm218, %v650, %v632
    %v652 = vrot.slane %v632, 4
    %v653 = vsel %vm218, %v638, %v652
    %v655 = vunpack.c.l.s4 1934713408
    %v656 = vunpack.c.0.s8 %v655
    %v657 = vperm.slane %v651, %v656
    %v659 = vunpack.c.l.s4 1934713408
    %v660 = vunpack.c.0.s8 %v659
    %v661 = vperm.slane %v653, %v660
    %v662 = vrot.slane %v649, 4
    %v663 = vsel %vm218, %v662, %v643
    %v664 = vrot.slane %v643, 4
    %v665 = vsel %vm218, %v649, %v664
    %v667 = vunpack.c.l.s4 1934713408
    %v668 = vunpack.c.0.s8 %v667
    %v669 = vperm.slane %v663, %v668
    %v671 = vunpack.c.l.s4 1934713408
    %v672 = vunpack.c.0.s8 %v671
    %v673 = vperm.slane %v665, %v672
    %v674 = vrot.slane %v669, 4
    %v675 = vsel %vm218, %v674, %v657
    %v676 = vrot.slane %v657, 4
    %v677 = vsel %vm218, %v669, %v676
    %v678 = vrot.slane %v673, 4
    %v679 = vsel %vm218, %v678, %v661
    %v680 = vrot.slane %v661, 4
    %v681 = vsel %vm218, %v673, %v680
    %684 = vrot.lane.b32.xlu0 %v192, 112
    %v685 = vpop.permute.xlu0 %684
    %686 = vrot.lane.b32.xlu0 %v195, 112
    %v687 = vpop.permute.xlu0 %686
    %690 = vrot.lane.b32.xlu0 %v192, 96
    %v691 = vpop.permute.xlu0 %690
    %692 = vrot.lane.b32.xlu0 %v195, 96
    %v693 = vpop.permute.xlu0 %692
    %696 = vrot.lane.b32.xlu0 %v192, 80
    %v697 = vpop.permute.xlu0 %696
    %698 = vrot.lane.b32.xlu0 %v195, 80
    %v699 = vpop.permute.xlu0 %698
    %v702 = vrot.slane %v691, 4
    %v703 = vsel %vm218, %v702, %v192
    %v704 = vrot.slane %v192, 4
    %v705 = vsel %vm218, %v691, %v704
    %v707 = vunpack.c.l.s4 1983009808
    %v708 = vunpack.c.0.s8 %v707
    %v709 = vperm.slane %v703, %v708
    %v711 = vunpack.c.l.s4 1983009808
    %v712 = vunpack.c.0.s8 %v711
    %v713 = vperm.slane %v705, %v712
    %v714 = vrot.slane %v697, 4
    %v715 = vsel %vm218, %v714, %v685
    %v716 = vrot.slane %v685, 4
    %v717 = vsel %vm218, %v697, %v716
    %v719 = vunpack.c.l.s4 1983009808
    %v720 = vunpack.c.0.s8 %v719
    %v721 = vperm.slane %v715, %v720
    %v723 = vunpack.c.l.s4 1983009808
    %v724 = vunpack.c.0.s8 %v723
    %v725 = vperm.slane %v717, %v724
    %v726 = vrot.slane %v721, 4
    %v727 = vsel %vm218, %v726, %v709
    %v728 = vrot.slane %v709, 4
    %v729 = vsel %vm218, %v721, %v728
    %v731 = vunpack.c.l.s4 1934713408
    %v732 = vunpack.c.0.s8 %v731
    %v733 = vperm.slane %v727, %v732
    %v735 = vunpack.c.l.s4 1934713408
    %v736 = vunpack.c.0.s8 %v735
    %v737 = vperm.slane %v729, %v736
    %v738 = vrot.slane %v725, 4
    %v739 = vsel %vm218, %v738, %v713
    %v740 = vrot.slane %v713, 4
    %v741 = vsel %vm218, %v725, %v740
    %v743 = vunpack.c.l.s4 1934713408
    %v744 = vunpack.c.0.s8 %v743
    %v745 = vperm.slane %v739, %v744
    %v747 = vunpack.c.l.s4 1934713408
    %v748 = vunpack.c.0.s8 %v747
    %v749 = vperm.slane %v741, %v748
    %v750 = vrot.slane %v733, 4
    %v751 = vsel %vm218, 0.0, %v750
    %v752 = vrot.slane %v737, 4
    %v753 = vsel %vm218, 0.0, %v752
    %v754 = vrot.slane %v745, 4
    %v755 = vsel %vm218, 0.0, %v754
    %v756 = vrot.slane %v749, 4
    %v757 = vsel %vm218, 0.0, %v756
    %v758 = vrot.slane %v693, 4
    %v759 = vsel %vm218, %v758, %v195
    %v760 = vrot.slane %v195, 4
    %v761 = vsel %vm218, %v693, %v760
    %v763 = vunpack.c.l.s4 1983009808
    %v764 = vunpack.c.0.s8 %v763
    %v765 = vperm.slane %v759, %v764
    %v767 = vunpack.c.l.s4 1983009808
    %v768 = vunpack.c.0.s8 %v767
    %v769 = vperm.slane %v761, %v768
    %v770 = vrot.slane %v699, 4
    %v771 = vsel %vm218, %v770, %v687
    %v772 = vrot.slane %v687, 4
    %v773 = vsel %vm218, %v699, %v772
    %v775 = vunpack.c.l.s4 1983009808
    %v776 = vunpack.c.0.s8 %v775
    %v777 = vperm.slane %v771, %v776
    %v779 = vunpack.c.l.s4 1983009808
    %v780 = vunpack.c.0.s8 %v779
    %v781 = vperm.slane %v773, %v780
    %v782 = vrot.slane %v777, 4
    %v783 = vsel %vm218, %v782, %v765
    %v784 = vrot.slane %v765, 4
    %v785 = vsel %vm218, %v777, %v784
    %v787 = vunpack.c.l.s4 1934713408
    %v788 = vunpack.c.0.s8 %v787
    %v789 = vperm.slane %v783, %v788
    %v791 = vunpack.c.l.s4 1934713408
    %v792 = vunpack.c.0.s8 %v791
    %v793 = vperm.slane %v785, %v792
    %v794 = vrot.slane %v781, 4
    %v795 = vsel %vm218, %v794, %v769
    %v796 = vrot.slane %v769, 4
    %v797 = vsel %vm218, %v781, %v796
    %v799 = vunpack.c.l.s4 1934713408
    %v800 = vunpack.c.0.s8 %v799
    %v801 = vperm.slane %v795, %v800
    %v803 = vunpack.c.l.s4 1934713408
    %v804 = vunpack.c.0.s8 %v803
    %v805 = vperm.slane %v797, %v804
    %v806 = vrot.slane %v789, 4
    %v807 = vsel %vm218, 0.0, %v806
    %v808 = vrot.slane %v793, 4
    %v809 = vsel %vm218, 0.0, %v808
    %v810 = vrot.slane %v801, 4
    %v811 = vsel %vm218, 0.0, %v810
    %v812 = vrot.slane %v805, 4
    %v813 = vsel %vm218, 0.0, %v812
    %v814 = vsel %vm218, %v752, %v733
    %v816 = vunpack.c.l.s4 1983009808
    %v817 = vunpack.c.0.s8 %v816
    %v818 = vperm.slane %v814, %v817
    %v819 = vrot.slane %v753, 4
    %v820 = vsel %vm218, %v819, %v751
    %v822 = vunpack.c.l.s4 1983009808
    %v823 = vunpack.c.0.s8 %v822
    %v824 = vperm.slane %v820, %v823
    %v825 = vsel %vm218, %v756, %v745
    %v827 = vunpack.c.l.s4 1983009808
    %v828 = vunpack.c.0.s8 %v827
    %v829 = vperm.slane %v825, %v828
    %v830 = vrot.slane %v757, 4
    %v831 = vsel %vm218, %v830, %v755
    %v833 = vunpack.c.l.s4 1983009808
    %v834 = vunpack.c.0.s8 %v833
    %v835 = vperm.slane %v831, %v834
    %v836 = vrot.slane %v824, 4
    %v837 = vsel %vm218, %v836, %v818
    %v838 = vrot.slane %v818, 4
    %v839 = vsel %vm218, %v824, %v838
    %v841 = vunpack.c.l.s4 1934713408
    %v842 = vunpack.c.0.s8 %v841
    %v843 = vperm.slane %v837, %v842
    %v845 = vunpack.c.l.s4 1934713408
    %v846 = vunpack.c.0.s8 %v845
    %v847 = vperm.slane %v839, %v846
    %v848 = vrot.slane %v835, 4
    %v849 = vsel %vm218, %v848, %v829
    %v850 = vrot.slane %v829, 4
    %v851 = vsel %vm218, %v835, %v850
    %v853 = vunpack.c.l.s4 1934713408
    %v854 = vunpack.c.0.s8 %v853
    %v855 = vperm.slane %v849, %v854
    %v857 = vunpack.c.l.s4 1934713408
    %v858 = vunpack.c.0.s8 %v857
    %v859 = vperm.slane %v851, %v858
    %v860 = vrot.slane %v855, 4
    %v861 = vsel %vm218, %v860, %v843
    %v862 = vrot.slane %v843, 4
    %v863 = vsel %vm218, %v855, %v862
    %v864 = vrot.slane %v859, 4
    %v865 = vsel %vm218, %v864, %v847
    %v866 = vrot.slane %v847, 4
    %v867 = vsel %vm218, %v859, %v866
    %v868 = vsel %vm218, %v808, %v789
    %v870 = vunpack.c.l.s4 1983009808
    %v871 = vunpack.c.0.s8 %v870
    %v872 = vperm.slane %v868, %v871
    %v873 = vrot.slane %v809, 4
    %v874 = vsel %vm218, %v873, %v807
    %v876 = vunpack.c.l.s4 1983009808
    %v877 = vunpack.c.0.s8 %v876
    %v878 = vperm.slane %v874, %v877
    %v879 = vsel %vm218, %v812, %v801
    %v881 = vunpack.c.l.s4 1983009808
    %v882 = vunpack.c.0.s8 %v881
    %v883 = vperm.slane %v879, %v882
    %v884 = vrot.slane %v813, 4
    %v885 = vsel %vm218, %v884, %v811
    %v887 = vunpack.c.l.s4 1983009808
    %v888 = vunpack.c.0.s8 %v887
    %v889 = vperm.slane %v885, %v888
    %v890 = vrot.slane %v878, 4
    %v891 = vsel %vm218, %v890, %v872
    %v892 = vrot.slane %v872, 4
    %v893 = vsel %vm218, %v878, %v892
    %v895 = vunpack.c.l.s4 1934713408
    %v896 = vunpack.c.0.s8 %v895
    %v897 = vperm.slane %v891, %v896
    %v899 = vunpack.c.l.s4 1934713408
    %v900 = vunpack.c.0.s8 %v899
    %v901 = vperm.slane %v893, %v900
    %v902 = vrot.slane %v889, 4
    %v903 = vsel %vm218, %v902, %v883
    %v904 = vrot.slane %v883, 4
    %v905 = vsel %vm218, %v889, %v904
    %v907 = vunpack.c.l.s4 1934713408
    %v908 = vunpack.c.0.s8 %v907
    %v909 = vperm.slane %v903, %v908
    %v911 = vunpack.c.l.s4 1934713408
    %v912 = vunpack.c.0.s8 %v911
    %v913 = vperm.slane %v905, %v912
    %v914 = vrot.slane %v909, 4
    %v915 = vsel %vm218, %v914, %v897
    %v916 = vrot.slane %v897, 4
    %v917 = vsel %vm218, %v909, %v916
    %v918 = vrot.slane %v913, 4
    %v919 = vsel %vm218, %v918, %v901
    %v920 = vrot.slane %v901, 4
    %v921 = vsel %vm218, %v913, %v920
    %vm922 = vcmask 130048
    %v924 = vsel %vm922, %v377, 0
    %v927 = vsel %vm922, %v621, 0
    %929 = vmatpush.xpose.msra.mxu0 0.0
    %930 = vmatpush.xpose.msra.mxu0 0.0
    %931 = vmatpush.xpose.msra.mxu0 0.0
    %932 = vmatpush.xpose.msra.mxu0 0.0
    %933 = vmatpush.xpose.msra.mxu0 0.0
    %934 = vmatpush.xpose.msra.mxu0 0.0
    %935 = vmatpush.xpose.msra.mxu0 0.0
    %936 = vmatpush.xpose.msra.mxu0 0.0
    %937 = vmatpush.xpose.msra.mxu0 0.0
    %938 = vmatpush.xpose.msra.mxu0 0.0
    %939 = vmatpush.xpose.msra.mxu0 0.0
    %940 = vmatpush.xpose.msra.mxu0 0.0
    %941 = vmatpush.xpose.msra.mxu0 0.0
    %942 = vmatpush.xpose.msra.mxu0 0.0
    %943 = vmatpush.xpose.msra.mxu0 0.0
    %944 = vmatpush.xpose.msra.mxu0 %v927
    %945 = vmatmul.f32.gmra.mxu0 %v924
    %v946 = vpop.f32.mrf.mxu0
    %v947 = vadd.f32 0.0, %v946
    %948 = vdwg.mxu0
    %v950 = vsel %vm922, %v431, 0
    %v953 = vsel %vm922, %v675, 0
    %955 = vmatpush.xpose.msra.mxu0 0.0
    %956 = vmatpush.xpose.msra.mxu0 0.0
    %957 = vmatpush.xpose.msra.mxu0 0.0
    %958 = vmatpush.xpose.msra.mxu0 0.0
    %959 = vmatpush.xpose.msra.mxu0 0.0
    %960 = vmatpush.xpose.msra.mxu0 0.0
    %961 = vmatpush.xpose.msra.mxu0 0.0
    %962 = vmatpush.xpose.msra.mxu0 0.0
    %963 = vmatpush.xpose.msra.mxu0 0.0
    %964 = vmatpush.xpose.msra.mxu0 0.0
    %965 = vmatpush.xpose.msra.mxu0 0.0
    %966 = vmatpush.xpose.msra.mxu0 0.0
    %967 = vmatpush.xpose.msra.mxu0 0.0
    %968 = vmatpush.xpose.msra.mxu0 0.0
    %969 = vmatpush.xpose.msra.mxu0 0.0
    %970 = vmatpush.xpose.msra.mxu0 %v953
    %971 = vmatmul.f32.gmra.mxu0 %v950
    %v972 = vpop.f32.mrf.mxu0
    %v973 = vadd.f32 0.0, %v972
    %974 = vdwg.mxu0
    %v976 = vsel %vm922, %v379, 0
    %v979 = vsel %vm922, %v623, 0
    %981 = vmatpush.xpose.msra.mxu0 0.0
    %982 = vmatpush.xpose.msra.mxu0 0.0
    %983 = vmatpush.xpose.msra.mxu0 0.0
    %984 = vmatpush.xpose.msra.mxu0 0.0
    %985 = vmatpush.xpose.msra.mxu0 0.0
    %986 = vmatpush.xpose.msra.mxu0 0.0
    %987 = vmatpush.xpose.msra.mxu0 0.0
    %988 = vmatpush.xpose.msra.mxu0 0.0
    %989 = vmatpush.xpose.msra.mxu0 0.0
    %990 = vmatpush.xpose.msra.mxu0 0.0
    %991 = vmatpush.xpose.msra.mxu0 0.0
    %992 = vmatpush.xpose.msra.mxu0 0.0
    %993 = vmatpush.xpose.msra.mxu0 0.0
    %994 = vmatpush.xpose.msra.mxu0 0.0
    %995 = vmatpush.xpose.msra.mxu0 0.0
    %996 = vmatpush.xpose.msra.mxu0 %v979
    %997 = vmatmul.f32.gmra.mxu0 %v976
    %v998 = vpop.f32.mrf.mxu0
    %v999 = vadd.f32 0.0, %v998
    %1000 = vdwg.mxu0
    %v1002 = vsel %vm922, %v433, 0
    %v1005 = vsel %vm922, %v677, 0
    %1007 = vmatpush.xpose.msra.mxu0 0.0
    %1008 = vmatpush.xpose.msra.mxu0 0.0
    %1009 = vmatpush.xpose.msra.mxu0 0.0
    %1010 = vmatpush.xpose.msra.mxu0 0.0
    %1011 = vmatpush.xpose.msra.mxu0 0.0
    %1012 = vmatpush.xpose.msra.mxu0 0.0
    %1013 = vmatpush.xpose.msra.mxu0 0.0
    %1014 = vmatpush.xpose.msra.mxu0 0.0
    %1015 = vmatpush.xpose.msra.mxu0 0.0
    %1016 = vmatpush.xpose.msra.mxu0 0.0
    %1017 = vmatpush.xpose.msra.mxu0 0.0
    %1018 = vmatpush.xpose.msra.mxu0 0.0
    %1019 = vmatpush.xpose.msra.mxu0 0.0
    %1020 = vmatpush.xpose.msra.mxu0 0.0
    %1021 = vmatpush.xpose.msra.mxu0 0.0
    %1022 = vmatpush.xpose.msra.mxu0 %v1005
    %1023 = vmatmul.f32.gmra.mxu0 %v1002
    %v1024 = vpop.f32.mrf.mxu0
    %v1025 = vadd.f32 0.0, %v1024
    %1026 = vdwg.mxu0
    %v1028 = vsel %vm922, %v381, 0
    %v1031 = vsel %vm922, %v625, 0
    %1033 = vmatpush.xpose.msra.mxu0 0.0
    %1034 = vmatpush.xpose.msra.mxu0 0.0
    %1035 = vmatpush.xpose.msra.mxu0 0.0
    %1036 = vmatpush.xpose.msra.mxu0 0.0
    %1037 = vmatpush.xpose.msra.mxu0 0.0
    %1038 = vmatpush.xpose.msra.mxu0 0.0
    %1039 = vmatpush.xpose.msra.mxu0 0.0
    %1040 = vmatpush.xpose.msra.mxu0 0.0
    %1041 = vmatpush.xpose.msra.mxu0 0.0
    %1042 = vmatpush.xpose.msra.mxu0 0.0
    %1043 = vmatpush.xpose.msra.mxu0 0.0
    %1044 = vmatpush.xpose.msra.mxu0 0.0
    %1045 = vmatpush.xpose.msra.mxu0 0.0
    %1046 = vmatpush.xpose.msra.mxu0 0.0
    %1047 = vmatpush.xpose.msra.mxu0 0.0
    %1048 = vmatpush.xpose.msra.mxu0 %v1031
    %1049 = vmatmul.f32.gmra.mxu0 %v1028
    %v1050 = vpop.f32.mrf.mxu0
    %v1051 = vadd.f32 0.0, %v1050
    %1052 = vdwg.mxu0
    %v1054 = vsel %vm922, %v435, 0
    %v1057 = vsel %vm922, %v679, 0
    %1059 = vmatpush.xpose.msra.mxu0 0.0
    %1060 = vmatpush.xpose.msra.mxu0 0.0
    %1061 = vmatpush.xpose.msra.mxu0 0.0
    %1062 = vmatpush.xpose.msra.mxu0 0.0
    %1063 = vmatpush.xpose.msra.mxu0 0.0
    %1064 = vmatpush.xpose.msra.mxu0 0.0
    %1065 = vmatpush.xpose.msra.mxu0 0.0
    %1066 = vmatpush.xpose.msra.mxu0 0.0
    %1067 = vmatpush.xpose.msra.mxu0 0.0
    %1068 = vmatpush.xpose.msra.mxu0 0.0
    %1069 = vmatpush.xpose.msra.mxu0 0.0
    %1070 = vmatpush.xpose.msra.mxu0 0.0
    %1071 = vmatpush.xpose.msra.mxu0 0.0
    %1072 = vmatpush.xpose.msra.mxu0 0.0
    %1073 = vmatpush.xpose.msra.mxu0 0.0
    %1074 = vmatpush.xpose.msra.mxu0 %v1057
    %1075 = vmatmul.f32.gmra.mxu0 %v1054
    %v1076 = vpop.f32.mrf.mxu0
    %v1077 = vadd.f32 0.0, %v1076
    %1078 = vdwg.mxu0
    %v1080 = vsel %vm922, %v383, 0
    %v1083 = vsel %vm922, %v627, 0
    %1085 = vmatpush.xpose.msra.mxu0 0.0
    %1086 = vmatpush.xpose.msra.mxu0 0.0
    %1087 = vmatpush.xpose.msra.mxu0 0.0
    %1088 = vmatpush.xpose.msra.mxu0 0.0
    %1089 = vmatpush.xpose.msra.mxu0 0.0
    %1090 = vmatpush.xpose.msra.mxu0 0.0
    %1091 = vmatpush.xpose.msra.mxu0 0.0
    %1092 = vmatpush.xpose.msra.mxu0 0.0
    %1093 = vmatpush.xpose.msra.mxu0 0.0
    %1094 = vmatpush.xpose.msra.mxu0 0.0
    %1095 = vmatpush.xpose.msra.mxu0 0.0
    %1096 = vmatpush.xpose.msra.mxu0 0.0
    %1097 = vmatpush.xpose.msra.mxu0 0.0
    %1098 = vmatpush.xpose.msra.mxu0 0.0
    %1099 = vmatpush.xpose.msra.mxu0 0.0
    %1100 = vmatpush.xpose.msra.mxu0 %v1083
    %1101 = vmatmul.f32.gmra.mxu0 %v1080
    %v1102 = vpop.f32.mrf.mxu0
    %v1103 = vadd.f32 0.0, %v1102
    %1104 = vdwg.mxu0
    %v1106 = vsel %vm922, %v437, 0
    %v1109 = vsel %vm922, %v681, 0
    %1111 = vmatpush.xpose.msra.mxu0 0.0
    %1112 = vmatpush.xpose.msra.mxu0 0.0
    %1113 = vmatpush.xpose.msra.mxu0 0.0
    %1114 = vmatpush.xpose.msra.mxu0 0.0
    %1115 = vmatpush.xpose.msra.mxu0 0.0
    %1116 = vmatpush.xpose.msra.mxu0 0.0
    %1117 = vmatpush.xpose.msra.mxu0 0.0
    %1118 = vmatpush.xpose.msra.mxu0 0.0
    %1119 = vmatpush.xpose.msra.mxu0 0.0
    %1120 = vmatpush.xpose.msra.mxu0 0.0
    %1121 = vmatpush.xpose.msra.mxu0 0.0
    %1122 = vmatpush.xpose.msra.mxu0 0.0
    %1123 = vmatpush.xpose.msra.mxu0 0.0
    %1124 = vmatpush.xpose.msra.mxu0 0.0
    %1125 = vmatpush.xpose.msra.mxu0 0.0
    %1126 = vmatpush.xpose.msra.mxu0 %v1109
    %1127 = vmatmul.f32.gmra.mxu0 %v1106
    %v1128 = vpop.f32.mrf.mxu0
    %v1129 = vadd.f32 0.0, %v1128
    %1130 = vdwg.mxu0
    %vm1131 = vcmask 64512
    %v1132 = vsel %vm1131, %v947, -inf
    %1133 = vmax.xlane.f32.xlu0 %v1132
    %v1134 = vpop.xlane.xlu0 %1133
    %v1135 = vsel %vm1131, %v973, -inf
    %1136 = vmax.xlane.f32.xlu0 %v1135
    %v1137 = vpop.xlane.xlu0 %1136
    %v1138 = vsel %vm1131, %v999, -inf
    %1139 = vmax.xlane.f32.xlu0 %v1138
    %v1140 = vpop.xlane.xlu0 %1139
    %v1141 = vsel %vm1131, %v1025, -inf
    %1142 = vmax.xlane.f32.xlu0 %v1141
    %v1143 = vpop.xlane.xlu0 %1142
    %v1144 = vsel %vm1131, %v1051, -inf
    %1145 = vmax.xlane.f32.xlu0 %v1144
    %v1146 = vpop.xlane.xlu0 %1145
    %v1147 = vsel %vm1131, %v1077, -inf
    %1148 = vmax.xlane.f32.xlu0 %v1147
    %v1149 = vpop.xlane.xlu0 %1148
    %v1150 = vsel %vm1131, %v1103, -inf
    %1151 = vmax.xlane.f32.xlu0 %v1150
    %v1152 = vpop.xlane.xlu0 %1151
    %v1153 = vsel %vm1131, %v1129, -inf
    %1154 = vmax.xlane.f32.xlu0 %v1153
    %v1155 = vpop.xlane.xlu0 %1154
    %v1156 = vsub.f32 %v947, %v1134
    %v1157 = vsub.f32 %v973, %v1137
    %v1158 = vsub.f32 %v999, %v1140
    %v1159 = vsub.f32 %v1025, %v1143
    %v1160 = vsub.f32 %v1051, %v1146
    %v1161 = vsub.f32 %v1077, %v1149
    %v1162 = vsub.f32 %v1103, %v1152
    %v1163 = vsub.f32 %v1129, %v1155
    %v1164 = vmul.f32 %v1156, 1.442695
    %v1165 = vpow.pop %v1164
    %v1166 = vmul.f32 %v1157, 1.442695
    %v1167 = vpow.pop %v1166
    %v1168 = vmul.f32 %v1158, 1.442695
    %v1169 = vpow.pop %v1168
    %v1170 = vmul.f32 %v1159, 1.442695
    %v1171 = vpow.pop %v1170
    %v1172 = vmul.f32 %v1160, 1.442695
    %v1173 = vpow.pop %v1172
    %v1174 = vmul.f32 %v1161, 1.442695
    %v1175 = vpow.pop %v1174
    %v1176 = vmul.f32 %v1162, 1.442695
    %v1177 = vpow.pop %v1176
    %v1178 = vmul.f32 %v1163, 1.442695
    %v1179 = vpow.pop %v1178
    %v1180 = vsel %vm1131, %v1165, 0.0
    %1181 = vadd.xlane.f32.xlu0 %v1180
    %v1182 = vpop.xlane.xlu0 %1181
    %v1183 = vsel %vm1131, %v1167, 0.0
    %1184 = vadd.xlane.f32.xlu0 %v1183
    %v1185 = vpop.xlane.xlu0 %1184
    %v1186 = vsel %vm1131, %v1169, 0.0
    %1187 = vadd.xlane.f32.xlu0 %v1186
    %v1188 = vpop.xlane.xlu0 %1187
    %v1189 = vsel %vm1131, %v1171, 0.0
    %1190 = vadd.xlane.f32.xlu0 %v1189
    %v1191 = vpop.xlane.xlu0 %1190
    %v1192 = vsel %vm1131, %v1173, 0.0
    %1193 = vadd.xlane.f32.xlu0 %v1192
    %v1194 = vpop.xlane.xlu0 %1193
    %v1195 = vsel %vm1131, %v1175, 0.0
    %1196 = vadd.xlane.f32.xlu0 %v1195
    %v1197 = vpop.xlane.xlu0 %1196
    %v1198 = vsel %vm1131, %v1177, 0.0
    %1199 = vadd.xlane.f32.xlu0 %v1198
    %v1200 = vpop.xlane.xlu0 %1199
    %v1201 = vsel %vm1131, %v1179, 0.0
    %1202 = vadd.xlane.f32.xlu0 %v1201
    %v1203 = vpop.xlane.xlu0 %1202
    %v1205 = vsel %vm1131, %v1165, 0
    %1207 = vmatpush.msra.mxu0 0.0
    %1208 = vmatpush.msra.mxu0 0.0
    %1209 = vmatpush.msra.mxu0 0.0
    %1210 = vmatpush.msra.mxu0 0.0
    %1211 = vmatpush.msra.mxu0 0.0
    %1212 = vmatpush.msra.mxu0 0.0
    %1213 = vmatpush.msra.mxu0 0.0
    %1214 = vmatpush.msra.mxu0 0.0
    %1215 = vmatpush.msra.mxu0 0.0
    %1216 = vmatpush.msra.mxu0 0.0
    %1217 = vmatpush.msra.mxu0 0.0
    %1218 = vmatpush.msra.mxu0 0.0
    %1219 = vmatpush.msra.mxu0 0.0
    %1220 = vmatpush.msra.mxu0 0.0
    %1221 = vmatpush.msra.mxu0 0.0
    %1222 = vmatpush.msra.mxu0 %v861
    %1223 = vmatmul.f32.gmra.mxu0 %v1205
    %v1224 = vpop.f32.mrf.mxu0
    %v1225 = vadd.f32 0.0, %v1224
    %1226 = vdwg.mxu0
    %v1228 = vsel %vm1131, %v1167, 0
    %1230 = vmatpush.msra.mxu0 0.0
    %1231 = vmatpush.msra.mxu0 0.0
    %1232 = vmatpush.msra.mxu0 0.0
    %1233 = vmatpush.msra.mxu0 0.0
    %1234 = vmatpush.msra.mxu0 0.0
    %1235 = vmatpush.msra.mxu0 0.0
    %1236 = vmatpush.msra.mxu0 0.0
    %1237 = vmatpush.msra.mxu0 0.0
    %1238 = vmatpush.msra.mxu0 0.0
    %1239 = vmatpush.msra.mxu0 0.0
    %1240 = vmatpush.msra.mxu0 0.0
    %1241 = vmatpush.msra.mxu0 0.0
    %1242 = vmatpush.msra.mxu0 0.0
    %1243 = vmatpush.msra.mxu0 0.0
    %1244 = vmatpush.msra.mxu0 0.0
    %1245 = vmatpush.msra.mxu0 %v915
    %1246 = vmatmul.f32.gmra.mxu0 %v1228
    %v1247 = vpop.f32.mrf.mxu0
    %v1248 = vadd.f32 0.0, %v1247
    %1249 = vdwg.mxu0
    %v1251 = vsel %vm1131, %v1169, 0
    %1253 = vmatpush.msra.mxu0 0.0
    %1254 = vmatpush.msra.mxu0 0.0
    %1255 = vmatpush.msra.mxu0 0.0
    %1256 = vmatpush.msra.mxu0 0.0
    %1257 = vmatpush.msra.mxu0 0.0
    %1258 = vmatpush.msra.mxu0 0.0
    %1259 = vmatpush.msra.mxu0 0.0
    %1260 = vmatpush.msra.mxu0 0.0
    %1261 = vmatpush.msra.mxu0 0.0
    %1262 = vmatpush.msra.mxu0 0.0
    %1263 = vmatpush.msra.mxu0 0.0
    %1264 = vmatpush.msra.mxu0 0.0
    %1265 = vmatpush.msra.mxu0 0.0
    %1266 = vmatpush.msra.mxu0 0.0
    %1267 = vmatpush.msra.mxu0 0.0
    %1268 = vmatpush.msra.mxu0 %v863
    %1269 = vmatmul.f32.gmra.mxu0 %v1251
    %v1270 = vpop.f32.mrf.mxu0
    %v1271 = vadd.f32 0.0, %v1270
    %1272 = vdwg.mxu0
    %v1274 = vsel %vm1131, %v1171, 0
    %1276 = vmatpush.msra.mxu0 0.0
    %1277 = vmatpush.msra.mxu0 0.0
    %1278 = vmatpush.msra.mxu0 0.0
    %1279 = vmatpush.msra.mxu0 0.0
    %1280 = vmatpush.msra.mxu0 0.0
    %1281 = vmatpush.msra.mxu0 0.0
    %1282 = vmatpush.msra.mxu0 0.0
    %1283 = vmatpush.msra.mxu0 0.0
    %1284 = vmatpush.msra.mxu0 0.0
    %1285 = vmatpush.msra.mxu0 0.0
    %1286 = vmatpush.msra.mxu0 0.0
    %1287 = vmatpush.msra.mxu0 0.0
    %1288 = vmatpush.msra.mxu0 0.0
    %1289 = vmatpush.msra.mxu0 0.0
    %1290 = vmatpush.msra.mxu0 0.0
    %1291 = vmatpush.msra.mxu0 %v917
    %1292 = vmatmul.f32.gmra.mxu0 %v1274
    %v1293 = vpop.f32.mrf.mxu0
    %v1294 = vadd.f32 0.0, %v1293
    %1295 = vdwg.mxu0
    %v1297 = vsel %vm1131, %v1173, 0
    %1299 = vmatpush.msra.mxu0 0.0
    %1300 = vmatpush.msra.mxu0 0.0
    %1301 = vmatpush.msra.mxu0 0.0
    %1302 = vmatpush.msra.mxu0 0.0
    %1303 = vmatpush.msra.mxu0 0.0
    %1304 = vmatpush.msra.mxu0 0.0
    %1305 = vmatpush.msra.mxu0 0.0
    %1306 = vmatpush.msra.mxu0 0.0
    %1307 = vmatpush.msra.mxu0 0.0
    %1308 = vmatpush.msra.mxu0 0.0
    %1309 = vmatpush.msra.mxu0 0.0
    %1310 = vmatpush.msra.mxu0 0.0
    %1311 = vmatpush.msra.mxu0 0.0
    %1312 = vmatpush.msra.mxu0 0.0
    %1313 = vmatpush.msra.mxu0 0.0
    %1314 = vmatpush.msra.mxu0 %v865
    %1315 = vmatmul.f32.gmra.mxu0 %v1297
    %v1316 = vpop.f32.mrf.mxu0
    %v1317 = vadd.f32 0.0, %v1316
    %1318 = vdwg.mxu0
    %v1320 = vsel %vm1131, %v1175, 0
    %1322 = vmatpush.msra.mxu0 0.0
    %1323 = vmatpush.msra.mxu0 0.0
    %1324 = vmatpush.msra.mxu0 0.0
    %1325 = vmatpush.msra.mxu0 0.0
    %1326 = vmatpush.msra.mxu0 0.0
    %1327 = vmatpush.msra.mxu0 0.0
    %1328 = vmatpush.msra.mxu0 0.0
    %1329 = vmatpush.msra.mxu0 0.0
    %1330 = vmatpush.msra.mxu0 0.0
    %1331 = vmatpush.msra.mxu0 0.0
    %1332 = vmatpush.msra.mxu0 0.0
    %1333 = vmatpush.msra.mxu0 0.0
    %1334 = vmatpush.msra.mxu0 0.0
    %1335 = vmatpush.msra.mxu0 0.0
    %1336 = vmatpush.msra.mxu0 0.0
    %1337 = vmatpush.msra.mxu0 %v919
    %1338 = vmatmul.f32.gmra.mxu0 %v1320
    %v1339 = vpop.f32.mrf.mxu0
    %v1340 = vadd.f32 0.0, %v1339
    %1341 = vdwg.mxu0
    %v1343 = vsel %vm1131, %v1177, 0
    %1345 = vmatpush.msra.mxu0 0.0
    %1346 = vmatpush.msra.mxu0 0.0
    %1347 = vmatpush.msra.mxu0 0.0
    %1348 = vmatpush.msra.mxu0 0.0
    %1349 = vmatpush.msra.mxu0 0.0
    %1350 = vmatpush.msra.mxu0 0.0
    %1351 = vmatpush.msra.mxu0 0.0
    %1352 = vmatpush.msra.mxu0 0.0
    %1353 = vmatpush.msra.mxu0 0.0
    %1354 = vmatpush.msra.mxu0 0.0
    %1355 = vmatpush.msra.mxu0 0.0
    %1356 = vmatpush.msra.mxu0 0.0
    %1357 = vmatpush.msra.mxu0 0.0
    %1358 = vmatpush.msra.mxu0 0.0
    %1359 = vmatpush.msra.mxu0 0.0
    %1360 = vmatpush.msra.mxu0 %v867
    %1361 = vmatmul.f32.gmra.mxu0 %v1343
    %v1362 = vpop.f32.mrf.mxu0
    %v1363 = vadd.f32 0.0, %v1362
    %1364 = vdwg.mxu0
    %v1366 = vsel %vm1131, %v1179, 0
    %1368 = vmatpush.msra.mxu0 0.0
    %1369 = vmatpush.msra.mxu0 0.0
    %1370 = vmatpush.msra.mxu0 0.0
    %1371 = vmatpush.msra.mxu0 0.0
    %1372 = vmatpush.msra.mxu0 0.0
    %1373 = vmatpush.msra.mxu0 0.0
    %1374 = vmatpush.msra.mxu0 0.0
    %1375 = vmatpush.msra.mxu0 0.0
    %1376 = vmatpush.msra.mxu0 0.0
    %1377 = vmatpush.msra.mxu0 0.0
    %1378 = vmatpush.msra.mxu0 0.0
    %1379 = vmatpush.msra.mxu0 0.0
    %1380 = vmatpush.msra.mxu0 0.0
    %1381 = vmatpush.msra.mxu0 0.0
    %1382 = vmatpush.msra.mxu0 0.0
    %1383 = vmatpush.msra.mxu0 %v921
    %1384 = vmatmul.f32.gmra.mxu0 %v1366
    %v1385 = vpop.f32.mrf.mxu0
    %v1386 = vadd.f32 0.0, %v1385
    %1387 = vdwg.mxu0
    %v1388 = vrcp.pop %v1182
    %v1389 = vmul.f32 %v1182, %v1388
    %v1390 = vsub.f32 1.0, %v1389
    %v1391 = vmul.f32 %v1388, %v1390
    %v1392 = vadd.f32 %v1388, %v1391
    %vm1393 = vweird.f32 %v1182
    %vm1394 = vweird.f32 %v1388
    %vm1395 = vmor %vm1393, %vm1394
    %v1396 = vsel %vm1395, %v1388, %v1392
    %v1397 = vand.u32 2147483647, %v1182
    %vm1398 = vcmp.eq.f32.partialorder %v1397, 8.507059e+37
    %v1399 = vand.u32 %v1182, 2147483648
    %v1400 = vor.u32 1.1754944e-38, %v1399
    %v1401 = vsel %vm1398, %v1400, %v1396
    %v1402 = vrcp.pop %v1185
    %v1403 = vmul.f32 %v1185, %v1402
    %v1404 = vsub.f32 1.0, %v1403
    %v1405 = vmul.f32 %v1402, %v1404
    %v1406 = vadd.f32 %v1402, %v1405
    %vm1407 = vweird.f32 %v1185
    %vm1408 = vweird.f32 %v1402
    %vm1409 = vmor %vm1407, %vm1408
    %v1410 = vsel %vm1409, %v1402, %v1406
    %v1411 = vand.u32 2147483647, %v1185
    %vm1412 = vcmp.eq.f32.partialorder %v1411, 8.507059e+37
    %v1413 = vand.u32 %v1185, 2147483648
    %v1414 = vor.u32 1.1754944e-38, %v1413
    %v1415 = vsel %vm1412, %v1414, %v1410
    %v1416 = vrcp.pop %v1188
    %v1417 = vmul.f32 %v1188, %v1416
    %v1418 = vsub.f32 1.0, %v1417
    %v1419 = vmul.f32 %v1416, %v1418
    %v1420 = vadd.f32 %v1416, %v1419
    %vm1421 = vweird.f32 %v1188
    %vm1422 = vweird.f32 %v1416
    %vm1423 = vmor %vm1421, %vm1422
    %v1424 = vsel %vm1423, %v1416, %v1420
    %v1425 = vand.u32 2147483647, %v1188
    %vm1426 = vcmp.eq.f32.partialorder %v1425, 8.507059e+37
    %v1427 = vand.u32 %v1188, 2147483648
    %v1428 = vor.u32 1.1754944e-38, %v1427
    %v1429 = vsel %vm1426, %v1428, %v1424
    %v1430 = vrcp.pop %v1191
    %v1431 = vmul.f32 %v1191, %v1430
    %v1432 = vsub.f32 1.0, %v1431
    %v1433 = vmul.f32 %v1430, %v1432
    %v1434 = vadd.f32 %v1430, %v1433
    %vm1435 = vweird.f32 %v1191
    %vm1436 = vweird.f32 %v1430
    %vm1437 = vmor %vm1435, %vm1436
    %v1438 = vsel %vm1437, %v1430, %v1434
    %v1439 = vand.u32 2147483647, %v1191
    %vm1440 = vcmp.eq.f32.partialorder %v1439, 8.507059e+37
    %v1441 = vand.u32 %v1191, 2147483648
    %v1442 = vor.u32 1.1754944e-38, %v1441
    %v1443 = vsel %vm1440, %v1442, %v1438
    %v1444 = vrcp.pop %v1194
    %v1445 = vmul.f32 %v1194, %v1444
    %v1446 = vsub.f32 1.0, %v1445
    %v1447 = vmul.f32 %v1444, %v1446
    %v1448 = vadd.f32 %v1444, %v1447
    %vm1449 = vweird.f32 %v1194
    %vm1450 = vweird.f32 %v1444
    %vm1451 = vmor %vm1449, %vm1450
    %v1452 = vsel %vm1451, %v1444, %v1448
    %v1453 = vand.u32 2147483647, %v1194
    %vm1454 = vcmp.eq.f32.partialorder %v1453, 8.507059e+37
    %v1455 = vand.u32 %v1194, 2147483648
    %v1456 = vor.u32 1.1754944e-38, %v1455
    %v1457 = vsel %vm1454, %v1456, %v1452
    %v1458 = vrcp.pop %v1197
    %v1459 = vmul.f32 %v1197, %v1458
    %v1460 = vsub.f32 1.0, %v1459
    %v1461 = vmul.f32 %v1458, %v1460
    %v1462 = vadd.f32 %v1458, %v1461
    %vm1463 = vweird.f32 %v1197
    %vm1464 = vweird.f32 %v1458
    %vm1465 = vmor %vm1463, %vm1464
    %v1466 = vsel %vm1465, %v1458, %v1462
    %v1467 = vand.u32 2147483647, %v1197
    %vm1468 = vcmp.eq.f32.partialorder %v1467, 8.507059e+37
    %v1469 = vand.u32 %v1197, 2147483648
    %v1470 = vor.u32 1.1754944e-38, %v1469
    %v1471 = vsel %vm1468, %v1470, %v1466
    %v1472 = vrcp.pop %v1200
    %v1473 = vmul.f32 %v1200, %v1472
    %v1474 = vsub.f32 1.0, %v1473
    %v1475 = vmul.f32 %v1472, %v1474
    %v1476 = vadd.f32 %v1472, %v1475
    %vm1477 = vweird.f32 %v1200
    %vm1478 = vweird.f32 %v1472
    %vm1479 = vmor %vm1477, %vm1478
    %v1480 = vsel %vm1479, %v1472, %v1476
    %v1481 = vand.u32 2147483647, %v1200
    %vm1482 = vcmp.eq.f32.partialorder %v1481, 8.507059e+37
    %v1483 = vand.u32 %v1200, 2147483648
    %v1484 = vor.u32 1.1754944e-38, %v1483
    %v1485 = vsel %vm1482, %v1484, %v1480
    %v1486 = vrcp.pop %v1203
    %v1487 = vmul.f32 %v1203, %v1486
    %v1488 = vsub.f32 1.0, %v1487
    %v1489 = vmul.f32 %v1486, %v1488
    %v1490 = vadd.f32 %v1486, %v1489
    %vm1491 = vweird.f32 %v1203
    %vm1492 = vweird.f32 %v1486
    %vm1493 = vmor %vm1491, %vm1492
    %v1494 = vsel %vm1493, %v1486, %v1490
    %v1495 = vand.u32 2147483647, %v1203
    %vm1496 = vcmp.eq.f32.partialorder %v1495, 8.507059e+37
    %v1497 = vand.u32 %v1203, 2147483648
    %v1498 = vor.u32 1.1754944e-38, %v1497
    %v1499 = vsel %vm1496, %v1498, %v1494
    %v1500 = vmul.f32 %v1225, %v1401
    %v1501 = vmul.f32 %v1248, %v1415
    %v1502 = vmul.f32 %v1271, %v1429
    %v1503 = vmul.f32 %v1294, %v1443
    %v1504 = vmul.f32 %v1317, %v1457
    %v1505 = vmul.f32 %v1340, %v1471
    %v1506 = vmul.f32 %v1363, %v1485
    %v1507 = vmul.f32 %v1386, %v1499
    %v1508 = vld [vmem:[#allocation7] sm:$0xff]
    %v1509 = vld [vmem:[#allocation7 + $0x8] sm:$0xff]
    %s1510 = scalar_lea.vmem [#allocation7], 16
    %v1511 = vld [vmem:[%s1510] sm:$0xff]
    %v1512 = vld [vmem:[%s1510 + $0x8] sm:$0xff]
    %v1514 = vsel %vm922, %v1502, 0
    %v1517 = vsel %vm922, %v1503, 0
    %1519 = vmatpush.msra.mxu0 0.0
    %1520 = vmatpush.msra.mxu0 0.0
    %1521 = vmatpush.msra.mxu0 0.0
    %1522 = vmatpush.msra.mxu0 0.0
    %1523 = vmatpush.msra.mxu0 0.0
    %1524 = vmatpush.msra.mxu0 0.0
    %1525 = vmatpush.msra.mxu0 0.0
    %1526 = vmatpush.msra.mxu0 0.0
    %1527 = vmatpush.msra.mxu0 0.0
    %1528 = vmatpush.msra.mxu0 0.0
    %1529 = vmatpush.msra.mxu0 0.0
    %1530 = vmatpush.msra.mxu0 0.0
    %1531 = vmatpush.msra.mxu0 0.0
    %1532 = vmatpush.msra.mxu0 0.0
    %1533 = vmatpush.msra.mxu0 %v1512
    %1534 = vmatpush.msra.mxu0 %v1511
    %1535 = vmatmul.f32.gmra.mxu0 %v1514
    %v1536 = vpop.f32.mrf.mxu0
    %v1537 = vadd.f32 0.0, %v1536
    %1538 = vmatmul.f32.gmra.mxu0 %v1517
    %v1539 = vpop.f32.mrf.mxu0
    %v1540 = vadd.f32 0.0, %v1539
    %1541 = vdwg.mxu0
    %v1543 = vsel %vm922, %v1500, 0
    %v1546 = vsel %vm922, %v1501, 0
    %1548 = vmatpush.msra.mxu0 0.0
    %1549 = vmatpush.msra.mxu0 0.0
    %1550 = vmatpush.msra.mxu0 0.0
    %1551 = vmatpush.msra.mxu0 0.0
    %1552 = vmatpush.msra.mxu0 0.0
    %1553 = vmatpush.msra.mxu0 0.0
    %1554 = vmatpush.msra.mxu0 0.0
    %1555 = vmatpush.msra.mxu0 0.0
    %1556 = vmatpush.msra.mxu0 0.0
    %1557 = vmatpush.msra.mxu0 0.0
    %1558 = vmatpush.msra.mxu0 0.0
    %1559 = vmatpush.msra.mxu0 0.0
    %1560 = vmatpush.msra.mxu0 0.0
    %1561 = vmatpush.msra.mxu0 0.0
    %1562 = vmatpush.msra.mxu0 %v1509
    %1563 = vmatpush.msra.mxu0 %v1508
    %1564 = vmatmul.f32.gmra.mxu0 %v1543
    %v1565 = vpop.f32.mrf.mxu0
    %v1566 = vadd.f32 %v1537, %v1565
    %1567 = vmatmul.f32.gmra.mxu0 %v1546
    %v1568 = vpop.f32.mrf.mxu0
    %v1569 = vadd.f32 %v1540, %v1568
    %1570 = vdwg.mxu0
    %s1571 = scalar_lea.vmem [#allocation7], 32
    %v1572 = vld [vmem:[%s1571] sm:$0xff]
    %v1573 = vld [vmem:[%s1571 + $0x8] sm:$0xff]
    %v1575 = vsel %vm922, %v1504, 0
    %v1578 = vsel %vm922, %v1505, 0
    %1580 = vmatpush.msra.mxu0 0.0
    %1581 = vmatpush.msra.mxu0 0.0
    %1582 = vmatpush.msra.mxu0 0.0
    %1583 = vmatpush.msra.mxu0 0.0
    %1584 = vmatpush.msra.mxu0 0.0
    %1585 = vmatpush.msra.mxu0 0.0
    %1586 = vmatpush.msra.mxu0 0.0
    %1587 = vmatpush.msra.mxu0 0.0
    %1588 = vmatpush.msra.mxu0 0.0
    %1589 = vmatpush.msra.mxu0 0.0
    %1590 = vmatpush.msra.mxu0 0.0
    %1591 = vmatpush.msra.mxu0 0.0
    %1592 = vmatpush.msra.mxu0 0.0
    %1593 = vmatpush.msra.mxu0 0.0
    %1594 = vmatpush.msra.mxu0 %v1573
    %1595 = vmatpush.msra.mxu0 %v1572
    %1596 = vmatmul.f32.gmra.mxu0 %v1575
    %v1597 = vpop.f32.mrf.mxu0
    %v1598 = vadd.f32 0.0, %v1597
    %1599 = vmatmul.f32.gmra.mxu0 %v1578
    %v1600 = vpop.f32.mrf.mxu0
    %v1601 = vadd.f32 0.0, %v1600
    %1602 = vdwg.mxu0
    %v1603 = vadd.f32 %v1566, %v1598
    %v1604 = vadd.f32 %v1569, %v1601
    %s1605 = scalar_lea.vmem [#allocation7], 48
    %v1606 = vld [vmem:[%s1605] sm:$0xff]
    %v1607 = vld [vmem:[%s1605 + $0x8] sm:$0xff]
    %v1609 = vsel %vm922, %v1506, 0
    %v1612 = vsel %vm922, %v1507, 0
    %1614 = vmatpush.msra.mxu0 0.0
    %1615 = vmatpush.msra.mxu0 0.0
    %1616 = vmatpush.msra.mxu0 0.0
    %1617 = vmatpush.msra.mxu0 0.0
    %1618 = vmatpush.msra.mxu0 0.0
    %1619 = vmatpush.msra.mxu0 0.0
    %1620 = vmatpush.msra.mxu0 0.0
    %1621 = vmatpush.msra.mxu0 0.0
    %1622 = vmatpush.msra.mxu0 0.0
    %1623 = vmatpush.msra.mxu0 0.0
    %1624 = vmatpush.msra.mxu0 0.0
    %1625 = vmatpush.msra.mxu0 0.0
    %1626 = vmatpush.msra.mxu0 0.0
    %1627 = vmatpush.msra.mxu0 0.0
    %1628 = vmatpush.msra.mxu0 %v1607
    %1629 = vmatpush.msra.mxu0 %v1606
    %1630 = vmatmul.f32.gmra.mxu0 %v1609
    %v1631 = vpop.f32.mrf.mxu0
    %v1632 = vadd.f32 0.0, %v1631
    %1633 = vmatmul.f32.gmra.mxu0 %v1612
    %v1634 = vpop.f32.mrf.mxu0
    %v1635 = vadd.f32 0.0, %v1634
    %1636 = vdwg.mxu0
    %v1637 = vadd.f32 %v1603, %v1632
    %v1638 = vadd.f32 %v1604, %v1635
    %v1639 = vld [vmem:[%s5] sm:$0x1]
    %v1641 = vperm.slane %v1639, 0
    %v1643 = vadd.f32 %v1637, %v1641
    %v1644 = vadd.f32 %v1638, %v1641
    %1645 = vst [vmem:[#allocation8] sm:$0xff] %v1643
    %1646 = vst [vmem:[#allocation8 + $0x8] sm:$0xff] %v1644
    // Predicated region
    $region38: #{tpu_custom_call.1} parent=1 // pred_check
      _
    $region39: #{tpu_custom_call.1} parent=1 // pred_check_branch
      %1648 = sbr.rel (0) target = $region41
    $region40: #{tpu_custom_call.1} parent=1 // pred_region
      %1650 = vsyncadd [#allocation4], 0
      %s1651 = sshll.u32 [#allocation8], 4
      %s1652 = int_to_ptr.vmem [resolvable:$true] %s1651
      %s1653 = sshll.u32 %s6, 4
      %s1654 = int_to_ptr.hbm [resolvable:$true] %s1653
      %1659 = dma.vmem_to_hbm [thread:$0]  %s1652, 256, %s1654, [#allocation4], 128, 128, 8
    $region41: #{tpu_custom_call.1} parent=1 // pred_fallthru
      _
    // Predicated region
    $region42: #{tpu_custom_call.1} parent=1 // pred_check
      _
    $region43: #{tpu_custom_call.1} parent=1 // pred_check_branch
      %1661 = sbr.rel (0) target = $region45
    $region44: #{tpu_custom_call.1} parent=1 // pred_region
      %1663 = dma.done [#allocation4], 256
    $region45: #{tpu_custom_call.1} parent=1 // pred_fallthru
      _
    %1664 = vsyncpa [#allocation3], 1
    %1665 = vsyncpa [#allocation6], 1
    %1666 = vsyncpa [#allocation4], 1

</llo_original>
